<compile_context>
chip_gen: v5e
topology: v5e:2x2
jax: 0.10.0
libtpu: 0.0.40
codegen_flags: <defaults>
</compile_context>

<pallas_src>
import math
import numpy as np

import jax
import jax.numpy as jnp
from jax import lax
from jax.experimental import pallas as pl
from jax.experimental.pallas import tpu as pltpu  # noqa: F401  (no tiling/params needed; see review item 8)


# Set DOT1_DTYPE = jnp.float32 and APPROX_SIGMOID = False for an all-f32
# validation run (matches the reference at tight tolerance).
DOT1_DTYPE = jnp.bfloat16
APPROX_SIGMOID = True


# ----------------------------------------------------------------------------
# Fused Pallas kernel: Linear(+bias)+ReLU+zero-insert -> ConvT3d+ReLU -> Conv3d
#   -> depth-half AdaptiveMaxPool -> Sigmoid -> H/W-half pool (repeat) -> store.
# Working layout: sublanes = (depth, channel) (final stage: (channel, depth)),
#                 lanes    = (batch, H*W).
# ----------------------------------------------------------------------------
def fused_decoder_kernel(xe_ref, wl_ref, mt_ref, bt_ref, acat_ref, bc_ref,
                         rep_ref, o_ref):
    # (1) Linear + bias + ReLU + ConvTranspose3d H/W stride-2 zero-insert
    #     (incl. output_padding), all folded into ONE bf16 MXU dot (f32 acc):
    #     xe = kron([x | 1].T, Zhw),  wl = [Wmat | bl_resh].
    ze = jnp.dot(wl_ref[...], xe_ref[...], preferred_element_type=jnp.float32)
    ze = jnp.maximum(ze, 0.0)                                    # (D0*C, B*H1*W1)

    # (2) ConvTranspose3d depth placement + channel mix (one kron-folded matrix),
    #     bias broadcast once, ReLU.
    a1 = jnp.dot(mt_ref[...], ze, preferred_element_type=jnp.float32)
    a1 = jnp.maximum(a1 + bt_ref[...], 0.0)                      # (D1*C, B*H1*W1)

    # (3) Conv3d fused with the DEPTH half of AdaptiveMaxPool3d.  A_lo/A_hi are
    #     stacked into one matrix (single MXU issue) and row-permuted on the host
    #     to (c, d) order so the final store needs no transpose.
    cat = jnp.dot(acat_ref[...], a1, preferred_element_type=jnp.float32)
    half = cat.shape[0] // 2
    pooled = jnp.maximum(cat[:half, :], cat[half:, :]) + bc_ref[...]  # (C*Dout, B*H1*W1)

    # (4) Sigmoid BEFORE the H/W repeat (repeat columns are one-hot, so sigmoid
    #     commutes with the right-multiply) -> 4x fewer EUP exp/recip.  The
    #     exponent is clamped so exp cannot overflow for very negative inputs.
    z = jnp.exp(jnp.minimum(-pooled, 60.0))
    denom = 1.0 + z
    if APPROX_SIGMOID:
        sig = pl.reciprocal(denom, approx=True)                  # EUP slot
    else:
        sig = 1.0 / denom

    # (5) H/W half of the adaptive pool (all windows size 1 == 2x nearest repeat)
    #     applied PER BATCH with the small Rhw, stored straight into the
    #     (b, c, d) row x (h, w) lane layout: two lane-dense 256-wide unmasked
    #     stores, and the wrapper reshape to (B, C, D, H, W) needs no transpose.
    hw1 = rep_ref.shape[0]
    cd = pooled.shape[0]
    n_b = pooled.shape[1] // hw1
    for b in range(n_b):                                         # B=2, static unroll
        sig_b = sig[:, b * hw1:(b + 1) * hw1]                    # (C*Dout, H1*W1)
        o_ref[b * cd:(b + 1) * cd, :] = jnp.dot(
            sig_b, rep_ref[...], preferred_element_type=jnp.float32)


def make_forward(ops, *, B, C, Dout, Hout, Wout, dot1_dtype=DOT1_DTYPE):
    wmat_aug, zhw, mt, bt_col, a_cat, bc_col, rep_hw = ops

    @jax.jit
    def forward(x):
        # kron([x | 1].T, Zhw): folds the Linear bias (ones column) and the
        # ConvTranspose H/W stride-2 zero-insert (incl. output_padding) into
        # dot 1's RHS -> no in-kernel bias add / zero-insert matmul needed.
        x_aug = jnp.concatenate([x, jnp.ones((x.shape[0], 1), x.dtype)], axis=1)
        xexp = jnp.kron(x_aug.T, zhw).astype(dot1_dtype)         # ((K+1)*HW0, B*H1*W1)
        out2d = pl.pallas_call(
            fused_decoder_kernel,
            out_shape=jax.ShapeDtypeStruct((B * C * Dout, Hout * Wout),
                                           jnp.float32),
            # grid=() single step: whole working set < 1 MiB, far under the
            # scoped VMEM limit on v5e/v6e/v7x -> no BlockSpec tiling, no
            # vmem_limit_bytes.
            # TODO(synk): for larger batch sizes, add a leading grid axis over
            # batch with dimension_semantics=("parallel",) to use both v7x TCs.
        )(xexp, wmat_aug, mt, bt_col, a_cat, bc_col, rep_hw)
        out = out2d.reshape(B, C, Dout, Hout, Wout)              # no transpose
        return out.squeeze(1) if C == 1 else out                 # torch .squeeze(dim=1)

    return forward


# ----------------------------------------------------------------------------
# Host-side construction of the kron-folded operand matrices (tiny, one-time).
# All operands are batch-agnostic; the batch dimension only enters via the
# wrapper's kron and the kernel's per-batch lane slices / row stores.
# ----------------------------------------------------------------------------
def _zero_insert_1d(n_in, stride, n_out):
    # ConvTranspose with kernel=1 along this axis: out[i*stride] = in[i];
    # remaining positions (incl. output_padding) stay zero.
    m = np.zeros((n_in, n_out), np.float32)
    for i in range(n_in):
        m[i, i * stride] = 1.0
    return m


def _repeat_1d(n_in, n_out):
    # AdaptiveMaxPool along an axis whose windows are all size 1 (pure repeat).
    # Every column is exactly one-hot -> sigmoid commutes with this matrix.
    m = np.zeros((n_in, n_out), np.float32)
    for o in range(n_out):
        lo = (o * n_in) // n_out
        hi = math.ceil((o + 1) * n_in / n_out)
        assert hi - lo == 1, "H/W adaptive-pool windows must be size 1 here"
        m[lo, o] = 1.0
    return m


def build_decoder_operands(Wl, bl, Wt, bt, Wc, bc, *, C, K, D0, H0, W0,
                           kt, kc, pad_t, pad_c, stride, out_pad_hw,
                           Dout, Hout, Wout, dot1_dtype=DOT1_DTYPE):
    # TODO(synk): only this config (single ker=3 block after the linear,
    # depth-pool windows <= 2, H/W pool windows == 1) is folded into structure
    # matrices; other CNN_3D_Decoder configs need extra kron factors / max terms.
    Wl, bl = np.asarray(Wl, np.float32), np.asarray(bl, np.float32)
    Wt, bt = np.asarray(Wt, np.float32), np.asarray(bt, np.float32)
    Wc, bc = np.asarray(Wc, np.float32), np.asarray(bc, np.float32)

    HW0 = H0 * W0
    D1 = (D0 - 1) * stride - 2 * pad_t + kt                  # depth after ConvT
    H1 = (H0 - 1) * stride + 1 + out_pad_hw                  # H/W after ConvT (k=1)
    W1 = (W0 - 1) * stride + 1 + out_pad_hw

    # Linear weight pre-permuted into the (d0*C+c, k*HW0+hw0) working layout, with
    # the bias appended as HW0 extra columns (consumed by the ones-column that the
    # wrapper appends to x): ze = ReLU([Wmat | bl_resh] @ kron([x | 1].T, Zhw)).
    Wmat = Wl.reshape(C, D0, HW0, K).transpose(1, 0, 3, 2).reshape(D0 * C, K * HW0)
    bl_resh = bl.reshape(C, D0, HW0).transpose(1, 0, 2).reshape(D0 * C, HW0)
    Wmat_aug = np.hstack([Wmat, bl_resh])                     # (D0*C, (K+1)*HW0)

    # H/W stride-2 zero-insert (incl. output_padding) for ONE batch element;
    # the I_B (x) Zhw block structure is realized for free by the wrapper's kron.
    Zhw = np.kron(_zero_insert_1d(H0, stride, H1),
                  _zero_insert_1d(W0, stride, W1))            # (HW0, H1*W1)

    # ConvTranspose3d: depth placement + channel mixing folded into one matrix.
    MT = np.zeros((D1 * C, D0 * C), np.float32)
    for kd in range(kt):
        P = np.zeros((D1, D0), np.float32)
        for i in range(D0):
            od = i * stride - pad_t + kd
            if 0 <= od < D1:
                P[od, i] = 1.0
        # ConvTranspose3d weight is (C_in, C_out, kD, 1, 1): mix[c_out, c_in]
        MT += np.kron(P, Wt[:, :, kd, 0, 0].T)

    # Conv3d: depth shift + channel mixing folded into one matrix.
    MC = np.zeros((D1 * C, D1 * C), np.float32)
    for kd in range(kc):
        S = np.zeros((D1, D1), np.float32)
        for od in range(D1):
            src = od - pad_c + kd
            if 0 <= src < D1:
                S[od, src] = 1.0
        MC += np.kron(S, Wc[:, :, kd, 0, 0])

    # Depth half of AdaptiveMaxPool3d (windows of size 1 or 2) fused into MC,
    # rows permuted (d,c) -> (c,d) so the kernel's store is already (b,c,d,h,w)
    # row-major:  pooled = max(A_lo @ a1, A_hi @ a1) + bc.
    Elo = np.zeros((Dout, D1), np.float32)
    Ehi = np.zeros((Dout, D1), np.float32)
    for o in range(Dout):
        lo = (o * D1) // Dout
        hi = math.ceil((o + 1) * D1 / Dout)
        assert hi - lo <= 2, "depth adaptive-pool windows must be size <= 2 here"
        Elo[o, lo] = 1.0
        Ehi[o, hi - 1] = 1.0

    def to_cd_rows(M):  # rows (d*C+c) -> rows (c*Dout+d)
        return M.reshape(Dout, C, -1).transpose(1, 0, 2).reshape(C * Dout, -1)

    A_lo = to_cd_rows(np.kron(Elo, np.eye(C, dtype=np.float32)) @ MC)
    A_hi = to_cd_rows(np.kron(Ehi, np.eye(C, dtype=np.float32)) @ MC)
    A_cat = np.vstack([A_lo, A_hi])                           # (2*C*Dout, D1*C)

    # H/W half of the adaptive pool: all windows size 1 == pure 2x repeat,
    # shipped once (batch-agnostic) and applied per batch inside the kernel.
    Rhw = np.kron(_repeat_1d(H1, Hout), _repeat_1d(W1, Wout))  # (H1*W1, Hout*Wout)

    bt_col = np.tile(bt, D1).reshape(D1 * C, 1).astype(np.float32)       # rows (d1*C+c)
    bc_col = np.repeat(bc, Dout).reshape(C * Dout, 1).astype(np.float32)  # rows (c*Dout+d)

    return (jnp.asarray(Wmat_aug, dtype=dot1_dtype),
            jnp.asarray(Zhw),                                  # used by wrapper kron
            jnp.asarray(MT), jnp.asarray(bt_col),
            jnp.asarray(A_cat), jnp.asarray(bc_col),
            jnp.asarray(Rhw))


# ----------------------------------------------------------------------------
# Pure-JAX/NumPy reference (lax convolutions + explicit adaptive pool)
# ----------------------------------------------------------------------------
def reference_forward(x, Wl, bl, Wt, bt, Wc, bc, *, B, C, D0, H0, W0, kt, kc,
                      pad_t, pad_c, out_spatial):
    h = jnp.maximum(x @ Wl.T + bl, 0.0).reshape(B, C, D0, H0, W0)

    # ConvTranspose3d == dilated conv with flipped, transposed weights
    rhs_t = jnp.flip(jnp.transpose(Wt, (1, 0, 2, 3, 4)), axis=(2, 3, 4))
    y = lax.conv_general_dilated(
        h, rhs_t, window_strides=(1, 1, 1),
        padding=[(kt - 1 - pad_t, kt - 1 - pad_t), (0, 1), (0, 1)],
        lhs_dilation=(2, 2, 2), rhs_dilation=(1, 1, 1),
        dimension_numbers=('NCDHW', 'OIDHW', 'NCDHW'))
    y = jnp.maximum(y + bt.reshape(1, C, 1, 1, 1), 0.0)

    y2 = lax.conv_general_dilated(
        y, Wc, window_strides=(1, 1, 1),
        padding=[(pad_c, pad_c), (0, 0), (0, 0)],
        dimension_numbers=('NCDHW', 'OIDHW', 'NCDHW'))
    y2 = y2 + bc.reshape(1, C, 1, 1, 1)

    y2_np = np.asarray(jax.device_get(y2))
    Din_d, Din_h, Din_w = y2_np.shape[2:]
    Do, Ho, Wo = out_spatial
    pooled = np.zeros((B, C, Do, Ho, Wo), np.float32)
    for od in range(Do):
        dlo, dhi = (od * Din_d) // Do, math.ceil((od + 1) * Din_d / Do)
        for oh in range(Ho):
            hlo, hhi = (oh * Din_h) // Ho, math.ceil((oh + 1) * Din_h / Ho)
            for ow in range(Wo):
                wlo, whi = (ow * Din_w) // Wo, math.ceil((ow + 1) * Din_w / Wo)
                pooled[:, :, od, oh, ow] = y2_np[:, :, dlo:dhi, hlo:hhi,
                                                 wlo:whi].max(axis=(2, 3, 4))
    return 1.0 / (1.0 + np.exp(-pooled))


# ----------------------------------------------------------------------------
if __name__ == "__main__":
    # Module hyper-parameters
    B, C, latent_dim, num_layers = 2, 8, 32, 2
    spatial = (16, 16, 16)
    dtype = jnp.float32

    D0 = spatial[0] // 2 ** num_layers      # 4
    H0 = spatial[1] // 2 ** num_layers      # 4
    W0 = spatial[2] // 2 ** num_layers      # 4
    F = C * D0 * H0 * W0                    # 512

    # Last (and only) conv block of the loop uses ker=3
    kt = kc = 3
    pad_t = (kt - 3) // 2                   # 0
    pad_c = (kc - 1) // 2                   # 1
    stride = 2
    Dout, Hout, Wout = spatial

    # Deterministic parameter init (synthetic, PyTorch layouts)
    key = jax.random.PRNGKey(0)
    ks = jax.random.split(key, 8)
    Wl = 0.2 * jax.random.normal(ks[0], (F, latent_dim), dtype)    # Linear (out,in)
    bl = 0.1 * jax.random.normal(ks[1], (F,), dtype)
    Wt = 0.3 * jax.random.normal(ks[2], (C, C, kt, 1, 1), dtype)   # ConvT3d (Cin,Cout,k,1,1)
    bt = 0.1 * jax.random.normal(ks[3], (C,), dtype)
    Wc = 0.3 * jax.random.normal(ks[4], (C, C, kc, 1, 1), dtype)   # Conv3d (Cout,Cin,k,1,1)
    bc = 0.1 * jax.random.normal(ks[5], (C,), dtype)
    x = jax.random.normal(ks[6], (B, latent_dim), dtype)

    # --- Pallas forward (single fused pallas_call, grid=()) --------------------
    ops = build_decoder_operands(
        Wl, bl, Wt, bt, Wc, bc, C=C, K=latent_dim, D0=D0, H0=H0, W0=W0,
        kt=kt, kc=kc, pad_t=pad_t, pad_c=pad_c, stride=stride, out_pad_hw=1,
        Dout=Dout, Hout=Hout, Wout=Wout, dot1_dtype=DOT1_DTYPE)
    forward = make_forward(ops, B=B, C=C, Dout=Dout, Hout=Hout, Wout=Wout,
                           dot1_dtype=DOT1_DTYPE)
    out = jax.block_until_ready(forward(x))

    # --- validate against the pure-JAX/NumPy reference ------------------------
    # Tolerance 1e-2: dot 1 runs with bf16 operands (x and the Linear weights
    # rounded once, f32 accumulation) and the sigmoid uses the approximate EUP
    # reciprocal; set DOT1_DTYPE=float32 / APPROX_SIGMOID=False for an all-f32
    # run that matches at tight tolerance.
    ref = reference_forward(x, Wl, bl, Wt, bt, Wc, bc, B=B, C=C, D0=D0, H0=H0,
                            W0=W0, kt=kt, kc=kc, pad_t=pad_t, pad_c=pad_c,
                            out_spatial=spatial)
    np.testing.assert_allclose(np.asarray(out), ref, rtol=1e-2, atol=1e-2)

    print("KERNEL_OK")
</pallas_src>

<mosaic_0001>
module attributes {stable_mosaic.version = 11 : i64} {
  func.func @fused_decoder_kernel(%arg0: memref<528x128xbf16, #tpu.memory_space<vmem>>, %arg1: memref<32x528xbf16, #tpu.memory_space<vmem>>, %arg2: memref<72x32xf32, #tpu.memory_space<vmem>>, %arg3: memref<72x1xf32, #tpu.memory_space<vmem>>, %arg4: memref<256x72xf32, #tpu.memory_space<vmem>>, %arg5: memref<128x1xf32, #tpu.memory_space<vmem>>, %arg6: memref<64x256xf32, #tpu.memory_space<vmem>>, %arg7: memref<256x256xf32, #tpu.memory_space<vmem>>) attributes {dimension_semantics = [], scalar_prefetch = 0 : i64, scratch_operands = 0 : i64, tpu.core_type = #tpu.core_type<tc>} {
    %c0 = arith.constant 0 : index
    %c0_0 = arith.constant 0 : index
    %0 = vector.load %arg1[%c0, %c0_0] : memref<32x528xbf16, #tpu.memory_space<vmem>>, vector<32x528xbf16>
    %c0_1 = arith.constant 0 : index
    %c0_2 = arith.constant 0 : index
    %1 = vector.load %arg0[%c0_1, %c0_2] : memref<528x128xbf16, #tpu.memory_space<vmem>>, vector<528x128xbf16>
    %cst = arith.constant dense<0.000000e+00> : vector<32x128xf32>
    %2 = tpu.matmul %0, %1, %cst {dimension_numbers = #tpu.dot_dimension_numbers<[1], [0], [0], [1], [0, 0, 1, 1], [], []>} : vector<32x528xbf16>, vector<528x128xbf16>, vector<32x128xf32> -> vector<32x128xf32>
    %cst_3 = arith.constant 0.000000e+00 : f32
    %3 = vector.broadcast %cst_3 : f32 to vector<32x128xf32>
    %4 = arith.maximumf %2, %3 : vector<32x128xf32>
    %c0_4 = arith.constant 0 : index
    %c0_5 = arith.constant 0 : index
    %5 = vector.load %arg2[%c0_4, %c0_5] : memref<72x32xf32, #tpu.memory_space<vmem>>, vector<72x32xf32>
    %cst_6 = arith.constant dense<0.000000e+00> : vector<72x128xf32>
    %6 = tpu.matmul %5, %4, %cst_6 {dimension_numbers = #tpu.dot_dimension_numbers<[1], [0], [0], [1], [0, 0, 1, 1], [], []>} : vector<72x32xf32>, vector<32x128xf32>, vector<72x128xf32> -> vector<72x128xf32>
    %c0_7 = arith.constant 0 : index
    %c0_8 = arith.constant 0 : index
    %7 = vector.load %arg3[%c0_7, %c0_8] : memref<72x1xf32, #tpu.memory_space<vmem>>, vector<72x1xf32>
    %8 = vector.broadcast %7 : vector<72x1xf32> to vector<72x128xf32>
    %9 = arith.addf %6, %8 : vector<72x128xf32>
    %cst_9 = arith.constant 0.000000e+00 : f32
    %10 = vector.broadcast %cst_9 : f32 to vector<72x128xf32>
    %11 = arith.maximumf %9, %10 : vector<72x128xf32>
    %c0_10 = arith.constant 0 : index
    %c0_11 = arith.constant 0 : index
    %12 = vector.load %arg4[%c0_10, %c0_11] : memref<256x72xf32, #tpu.memory_space<vmem>>, vector<256x72xf32>
    %cst_12 = arith.constant dense<0.000000e+00> : vector<256x128xf32>
    %13 = tpu.matmul %12, %11, %cst_12 {dimension_numbers = #tpu.dot_dimension_numbers<[1], [0], [0], [1], [0, 0, 1, 1], [], []>} : vector<256x72xf32>, vector<72x128xf32>, vector<256x128xf32> -> vector<256x128xf32>
    %14 = vector.extract_strided_slice %13 {offsets = [0, 0], sizes = [128, 128], strides = [1, 1]} : vector<256x128xf32> to vector<128x128xf32>
    %15 = vector.extract_strided_slice %13 {offsets = [128, 0], sizes = [128, 128], strides = [1, 1]} : vector<256x128xf32> to vector<128x128xf32>
    %16 = arith.maximumf %14, %15 : vector<128x128xf32>
    %c0_13 = arith.constant 0 : index
    %c0_14 = arith.constant 0 : index
    %17 = vector.load %arg5[%c0_13, %c0_14] : memref<128x1xf32, #tpu.memory_space<vmem>>, vector<128x1xf32>
    %18 = vector.broadcast %17 : vector<128x1xf32> to vector<128x128xf32>
    %19 = arith.addf %16, %18 : vector<128x128xf32>
    %cst_15 = arith.constant 0.000000e+00 : f32
    %20 = vector.broadcast %cst_15 : f32 to vector<128x128xf32>
    %21 = arith.subf %20, %19 : vector<128x128xf32>
    %cst_16 = arith.constant 6.000000e+01 : f32
    %22 = vector.broadcast %cst_16 : f32 to vector<128x128xf32>
    %23 = arith.minimumf %21, %22 : vector<128x128xf32>
    %24 = math.exp %23 : vector<128x128xf32>
    %cst_17 = arith.constant 1.000000e+00 : f32
    %25 = vector.broadcast %cst_17 : f32 to vector<128x128xf32>
    %26 = arith.addf %25, %24 : vector<128x128xf32>
    %27 = tpu.reciprocal %26 {approx = true} : vector<128x128xf32> -> vector<128x128xf32>
    %28 = vector.extract_strided_slice %27 {offsets = [0, 0], sizes = [128, 64], strides = [1, 1]} : vector<128x128xf32> to vector<128x64xf32>
    %c0_18 = arith.constant 0 : index
    %c0_19 = arith.constant 0 : index
    %29 = vector.load %arg6[%c0_18, %c0_19] : memref<64x256xf32, #tpu.memory_space<vmem>>, vector<64x256xf32>
    %cst_20 = arith.constant dense<0.000000e+00> : vector<128x256xf32>
    %30 = tpu.matmul %28, %29, %cst_20 {dimension_numbers = #tpu.dot_dimension_numbers<[1], [0], [0], [1], [0, 0, 1, 1], [], []>} : vector<128x64xf32>, vector<64x256xf32>, vector<128x256xf32> -> vector<128x256xf32>
    %c0_21 = arith.constant 0 : index
    %c0_22 = arith.constant 0 : index
    %31 = vector.load %arg7[%c0_21, %c0_22] : memref<256x256xf32, #tpu.memory_space<vmem>>, vector<128x256xf32>
    tpu.vector_store %arg7[%c0_21, %c0_22], %30 {strides = array<i32>} : memref<256x256xf32, #tpu.memory_space<vmem>>, vector<128x256xf32>,
    %32 = vector.extract_strided_slice %27 {offsets = [0, 64], sizes = [128, 64], strides = [1, 1]} : vector<128x128xf32> to vector<128x64xf32>
    %c0_23 = arith.constant 0 : index
    %c0_24 = arith.constant 0 : index
    %33 = vector.load %arg6[%c0_23, %c0_24] : memref<64x256xf32, #tpu.memory_space<vmem>>, vector<64x256xf32>
    %cst_25 = arith.constant dense<0.000000e+00> : vector<128x256xf32>
    %34 = tpu.matmul %32, %33, %cst_25 {dimension_numbers = #tpu.dot_dimension_numbers<[1], [0], [0], [1], [0, 0, 1, 1], [], []>} : vector<128x64xf32>, vector<64x256xf32>, vector<128x256xf32> -> vector<128x256xf32>
    %c128 = arith.constant 128 : index
    %c0_26 = arith.constant 0 : index
    %35 = vector.load %arg7[%c128, %c0_26] : memref<256x256xf32, #tpu.memory_space<vmem>>, vector<128x256xf32>
    tpu.vector_store %arg7[%c128, %c0_26], %34 {strides = array<i32>} : memref<256x256xf32, #tpu.memory_space<vmem>>, vector<128x256xf32>,
    return
  }
}

</mosaic_0001>

<llo_original>
// kernel: forward.1
$region0: #{forward.1}
  #allocation0 [shape = 'u32[]', space=smem, size = 0x4, offset = 0x4, fixed_abs, tag = 'smem constant byte address 0x4 - core index']
  #allocation1 [shape = 'u32[72,128]{1,0:T(1,128)}', space=vmem, size = 0x9000, scoped, tag = 'internal scratch']
  %s0 = inlined_call_operand.vmem [shape: bf16[528,128], index: 0, kind: input, shape index: {}]
  %s1 = inlined_call_operand.hbm [shape: bf16[32,528], index: 1, kind: input, shape index: {}]
  %s2 = inlined_call_operand.hbm [shape: f32[72,32], index: 2, kind: input, shape index: {}]
  %s3 = inlined_call_operand.hbm [shape: f32[72,1], index: 3, kind: input, shape index: {}]
  %s4 = inlined_call_operand.hbm [shape: f32[256,72], index: 4, kind: input, shape index: {}]
  %s5 = inlined_call_operand.hbm [shape: f32[128,1], index: 5, kind: input, shape index: {}]
  %s6 = inlined_call_operand.hbm [shape: f32[64,256], index: 6, kind: input, shape index: {}]
  %s7 = inlined_call_operand.vmem [shape: f32[256,256], index: 7, kind: output, shape index: {}]
  %s8 = sld [smem:[#allocation0]]
  $region62: #{forward.1} parent=0
    _
  %s10 = ssub.s32 1, %s8
  %s11 = scalar_select 0, %s10, %s8
  $region1: #{forward.1} parent=0
    #allocation2 [shape = 'u8[40960]{0}', space=vmem, size = 0xa000, scoped, tag = 'input window, operand 1, single buffered']
    #allocation3 [shape = 's32[1]{0}', space=sflag, size = 0x4, scoped, tag = 'scoped memory for forward.1']
    #allocation4 [shape = 'u8[36864]{0}', space=vmem, size = 0x9000, scoped, tag = 'input window, operand 2, single buffered']
    #allocation5 [shape = 's32[1]{0}', space=sflag, size = 0x4, scoped, tag = 'scoped memory for forward.1']
    #allocation6 [shape = 'u8[36864]{0}', space=vmem, size = 0x9000, scoped, tag = 'input window, operand 3, single buffered']
    #allocation7 [shape = 'u8[131072]{0}', space=vmem, size = 0x20000, scoped, tag = 'input window, operand 4, single buffered']
    #allocation8 [shape = 's32[1]{0}', space=sflag, size = 0x4, scoped, tag = 'scoped memory for forward.1']
    #allocation9 [shape = 'u8[65536]{0}', space=vmem, size = 0x10000, scoped, tag = 'input window, operand 5, single buffered']
    #allocation10 [shape = 'u8[65536]{0}', space=vmem, size = 0x10000, scoped, tag = 'input window, operand 6, single buffered']
    #allocation11 [shape = 's32[1]{0}', space=sflag, size = 0x4, scoped, tag = 'scoped memory for forward.1']
    %12 = vsyncpa [#allocation3], 0
    %13 = vsyncpa [#allocation5], 0
    %14 = vsyncpa [#allocation8], 0
    %15 = vsyncpa [#allocation11], 0
    // Predicated region
    $region2: #{forward.1} parent=1 // pred_check
      _
    $region3: #{forward.1} parent=1 // pred_check_branch
      %17 = sbr.rel (0) target = $region5
    $region4: #{forward.1} parent=1 // pred_region
      _
    $region5: #{forward.1} parent=1 // pred_fallthru
      _
    // Predicated region
    $region6: #{forward.1} parent=1 // pred_check
      _
    $region7: #{forward.1} parent=1 // pred_check_branch
      %19 = sbr.rel (0) target = $region9
    $region8: #{forward.1} parent=1 // pred_region
      %21 = vsyncadd [#allocation3], 0
      %s22 = sshll.u32 %s1, 4
      %s23 = int_to_ptr.hbm [resolvable:$true] %s22
      %s24 = sshll.u32 [#allocation2], 4
      %s25 = int_to_ptr.vmem [resolvable:$true] %s24
      %30 = dma.hbm_to_vmem [thread:$0]  %s23, 1280, %s25, [#allocation3], 320, 320, 20
    $region9: #{forward.1} parent=1 // pred_fallthru
      _
    // Predicated region
    $region10: #{forward.1} parent=1 // pred_check
      _
    $region11: #{forward.1} parent=1 // pred_check_branch
      %32 = sbr.rel (0) target = $region13
    $region12: #{forward.1} parent=1 // pred_region
      %34 = vsyncadd [#allocation5], 0
      %s35 = sshll.u32 %s2, 4
      %s36 = int_to_ptr.hbm [resolvable:$true] %s35
      %s37 = sshll.u32 [#allocation4], 4
      %s38 = int_to_ptr.vmem [resolvable:$true] %s37
      %43 = dma.hbm_to_vmem [thread:$0]  %s36, 1152, %s38, [#allocation5], 128, 128, 8
    $region13: #{forward.1} parent=1 // pred_fallthru
      _
    // Predicated region
    $region14: #{forward.1} parent=1 // pred_check
      _
    $region15: #{forward.1} parent=1 // pred_check_branch
      %45 = sbr.rel (0) target = $region17
    $region16: #{forward.1} parent=1 // pred_region
      %47 = vsyncadd [#allocation5], 0
      %s48 = sshll.u32 %s3, 4
      %s49 = int_to_ptr.hbm [resolvable:$true] %s48
      %s50 = sshll.u32 [#allocation6], 4
      %s51 = int_to_ptr.vmem [resolvable:$true] %s50
      %56 = dma.hbm_to_vmem [thread:$0]  %s49, 1152, %s51, [#allocation5], 128, 128, 8
    $region17: #{forward.1} parent=1 // pred_fallthru
      _
    // Predicated region
    $region18: #{forward.1} parent=1 // pred_check
      _
    $region19: #{forward.1} parent=1 // pred_check_branch
      %58 = sbr.rel (0) target = $region21
    $region20: #{forward.1} parent=1 // pred_region
      %60 = vsyncadd [#allocation8], 0
      %s61 = sshll.u32 %s4, 4
      %s62 = int_to_ptr.hbm [resolvable:$true] %s61
      %s63 = sshll.u32 [#allocation7], 4
      %s64 = int_to_ptr.vmem [resolvable:$true] %s63
      %69 = dma.hbm_to_vmem [thread:$0]  %s62, 4096, %s64, [#allocation8], 128, 128, 8
    $region21: #{forward.1} parent=1 // pred_fallthru
      _
    // Predicated region
    $region22: #{forward.1} parent=1 // pred_check
      _
    $region23: #{forward.1} parent=1 // pred_check_branch
      %71 = sbr.rel (0) target = $region25
    $region24: #{forward.1} parent=1 // pred_region
      %73 = vsyncadd [#allocation8], 0
      %s74 = sshll.u32 %s5, 4
      %s75 = int_to_ptr.hbm [resolvable:$true] %s74
      %s76 = sshll.u32 [#allocation9], 4
      %s77 = int_to_ptr.vmem [resolvable:$true] %s76
      %82 = dma.hbm_to_vmem [thread:$0]  %s75, 2048, %s77, [#allocation8], 128, 128, 8
    $region25: #{forward.1} parent=1 // pred_fallthru
      _
    // Predicated region
    $region26: #{forward.1} parent=1 // pred_check
      _
    $region27: #{forward.1} parent=1 // pred_check_branch
      %84 = sbr.rel (0) target = $region29
    $region28: #{forward.1} parent=1 // pred_region
      %86 = vsyncadd [#allocation11], 0
      %s87 = sshll.u32 %s6, 4
      %s88 = int_to_ptr.hbm [resolvable:$true] %s87
      %s89 = sshll.u32 [#allocation10], 4
      %s90 = int_to_ptr.vmem [resolvable:$true] %s89
      %95 = dma.hbm_to_vmem [thread:$0]  %s88, 2048, %s90, [#allocation11], 256, 256, 16
    $region29: #{forward.1} parent=1 // pred_fallthru
      _
    // Predicated region
    $region30: #{forward.1} parent=1 // pred_check
      _
    $region31: #{forward.1} parent=1 // pred_check_branch
      %97 = sbr.rel (0) target = $region33
    $region32: #{forward.1} parent=1 // pred_region
      %99 = dma.done [#allocation3], 1280
    $region33: #{forward.1} parent=1 // pred_fallthru
      _
    // Predicated region
    $region34: #{forward.1} parent=1 // pred_check
      _
    $region35: #{forward.1} parent=1 // pred_check_branch
      %101 = sbr.rel (0) target = $region37
    $region36: #{forward.1} parent=1 // pred_region
      %103 = dma.done [#allocation5], 1152
    $region37: #{forward.1} parent=1 // pred_fallthru
      _
    // Predicated region
    $region38: #{forward.1} parent=1 // pred_check
      _
    $region39: #{forward.1} parent=1 // pred_check_branch
      %105 = sbr.rel (0) target = $region41
    $region40: #{forward.1} parent=1 // pred_region
      %107 = dma.done [#allocation5], 1152
    $region41: #{forward.1} parent=1 // pred_fallthru
      _
    // Predicated region
    $region42: #{forward.1} parent=1 // pred_check
      _
    $region43: #{forward.1} parent=1 // pred_check_branch
      %109 = sbr.rel (0) target = $region45
    $region44: #{forward.1} parent=1 // pred_region
      %111 = dma.done [#allocation8], 4096
    $region45: #{forward.1} parent=1 // pred_fallthru
      _
    // Predicated region
    $region46: #{forward.1} parent=1 // pred_check
      _
    $region47: #{forward.1} parent=1 // pred_check_branch
      %113 = sbr.rel (0) target = $region49
    $region48: #{forward.1} parent=1 // pred_region
      %115 = dma.done [#allocation8], 2048
    $region49: #{forward.1} parent=1 // pred_fallthru
      _
    // Predicated region
    $region50: #{forward.1} parent=1 // pred_check
      _
    $region51: #{forward.1} parent=1 // pred_check_branch
      %117 = sbr.rel (0) target = $region53
    $region52: #{forward.1} parent=1 // pred_region
      %119 = dma.done [#allocation11], 2048
    $region53: #{forward.1} parent=1 // pred_fallthru
      _
    %v121 = vld [vmem:[#allocation2] sm:$0xff]
    %v122 = vld [vmem:[#allocation2 + $0x8] sm:$0xff]
    %v123 = vld [vmem:[#allocation2 + $0x10] sm:$0xf]
    %v124 = vld [vmem:[#allocation2 + $0x14] sm:$0xff]
    %v125 = vld [vmem:[#allocation2 + $0x1c] sm:$0xff]
    %v126 = vld [vmem:[#allocation2 + $0x24] sm:$0xf]
    %v127 = vld [vmem:[#allocation2 + $0x28] sm:$0xff]
    %v128 = vld [vmem:[#allocation2 + $0x30] sm:$0xff]
    %v129 = vld [vmem:[#allocation2 + $0x38] sm:$0xf]
    %v130 = vld [vmem:[#allocation2 + $0x3c] sm:$0xff]
    %v131 = vld [vmem:[#allocation2 + $0x44] sm:$0xff]
    %v132 = vld [vmem:[#allocation2 + $0x4c] sm:$0xf]
    %v133 = vld [vmem:[%s0] sm:$0xf]
    %v134 = vld [vmem:[%s0 + $0x4] sm:$0xf]
    %v135 = vld [vmem:[%s0 + $0x8] sm:$0xf]
    %v136 = vld [vmem:[%s0 + $0xc] sm:$0xf]
    %v137 = vld [vmem:[%s0 + $0x10] sm:$0xf]
    %v138 = vld [vmem:[%s0 + $0x14] sm:$0xf]
    %v139 = vld [vmem:[%s0 + $0x18] sm:$0xf]
    %v140 = vld [vmem:[%s0 + $0x1c] sm:$0xf]
    %v141 = vld [vmem:[%s0 + $0x20] sm:$0xf]
    %v142 = vld [vmem:[%s0 + $0x24] sm:$0xf]
    %v143 = vld [vmem:[%s0 + $0x28] sm:$0xf]
    %v144 = vld [vmem:[%s0 + $0x2c] sm:$0xf]
    %v145 = vld [vmem:[%s0 + $0x30] sm:$0xf]
    %v146 = vld [vmem:[%s0 + $0x34] sm:$0xf]
    %v147 = vld [vmem:[%s0 + $0x38] sm:$0xf]
    %v148 = vld [vmem:[%s0 + $0x3c] sm:$0xf]
    %v149 = vld [vmem:[%s0 + $0x40] sm:$0xf]
    %v150 = vld [vmem:[%s0 + $0x44] sm:$0xf]
    %v151 = vld [vmem:[%s0 + $0x48] sm:$0xf]
    %v152 = vld [vmem:[%s0 + $0x4c] sm:$0xf]
    %v153 = vld [vmem:[%s0 + $0x50] sm:$0xf]
    %v154 = vld [vmem:[%s0 + $0x54] sm:$0xf]
    %v155 = vld [vmem:[%s0 + $0x58] sm:$0xf]
    %v156 = vld [vmem:[%s0 + $0x5c] sm:$0xf]
    %v157 = vld [vmem:[%s0 + $0x60] sm:$0xf]
    %v158 = vld [vmem:[%s0 + $0x64] sm:$0xf]
    %v159 = vld [vmem:[%s0 + $0x68] sm:$0xf]
    %v160 = vld [vmem:[%s0 + $0x6c] sm:$0xf]
    %v161 = vld [vmem:[%s0 + $0x70] sm:$0xf]
    %v162 = vld [vmem:[%s0 + $0x74] sm:$0xf]
    %v163 = vld [vmem:[%s0 + $0x78] sm:$0xf]
    %v164 = vld [vmem:[%s0 + $0x7c] sm:$0xf]
    %v165 = vld [vmem:[%s0 + $0x80] sm:$0xf]
    %v166 = vld [vmem:[%s0 + $0x84] sm:$0xf]
    %v167 = vld [vmem:[%s0 + $0x88] sm:$0xf]
    %v168 = vld [vmem:[%s0 + $0x8c] sm:$0xf]
    %v169 = vld [vmem:[%s0 + $0x90] sm:$0xf]
    %v170 = vld [vmem:[%s0 + $0x94] sm:$0xf]
    %v171 = vld [vmem:[%s0 + $0x98] sm:$0xf]
    %v172 = vld [vmem:[%s0 + $0x9c] sm:$0xf]
    %v173 = vld [vmem:[%s0 + $0xa0] sm:$0xf]
    %v174 = vld [vmem:[%s0 + $0xa4] sm:$0xf]
    %v175 = vld [vmem:[%s0 + $0xa8] sm:$0xf]
    %v176 = vld [vmem:[%s0 + $0xac] sm:$0xf]
    %v177 = vld [vmem:[%s0 + $0xb0] sm:$0xf]
    %v178 = vld [vmem:[%s0 + $0xb4] sm:$0xf]
    %v179 = vld [vmem:[%s0 + $0xb8] sm:$0xf]
    %v180 = vld [vmem:[%s0 + $0xbc] sm:$0xf]
    %v181 = vld [vmem:[%s0 + $0xc0] sm:$0xf]
    %v182 = vld [vmem:[%s0 + $0xc4] sm:$0xf]
    %v183 = vld [vmem:[%s0 + $0xc8] sm:$0xf]
    %v184 = vld [vmem:[%s0 + $0xcc] sm:$0xf]
    %v185 = vld [vmem:[%s0 + $0xd0] sm:$0xf]
    %v186 = vld [vmem:[%s0 + $0xd4] sm:$0xf]
    %v187 = vld [vmem:[%s0 + $0xd8] sm:$0xf]
    %v188 = vld [vmem:[%s0 + $0xdc] sm:$0xf]
    %v189 = vld [vmem:[%s0 + $0xe0] sm:$0xf]
    %v190 = vld [vmem:[%s0 + $0xe4] sm:$0xf]
    %v191 = vld [vmem:[%s0 + $0xe8] sm:$0xf]
    %v192 = vld [vmem:[%s0 + $0xec] sm:$0xf]
    %v193 = vld [vmem:[%s0 + $0xf0] sm:$0xf]
    %v194 = vld [vmem:[%s0 + $0xf4] sm:$0xf]
    %v195 = vld [vmem:[%s0 + $0xf8] sm:$0xf]
    %v196 = vld [vmem:[%s0 + $0xfc] sm:$0xf]
    %v197 = vld [vmem:[%s0 + $0x100] sm:$0xf]
    %v198 = vld [vmem:[%s0 + $0x104] sm:$0xf]
    %v211 = vunpack.c.l.b16 %v121
    %v212 = vunpack.c.h.b16 %v121
    %v213 = vunpack.c.l.b16 %v122
    %v214 = vunpack.c.h.b16 %v122
    %v215 = vunpack.c.l.b16 %v123
    %v216 = vunpack.c.l.b16 %v124
    %v217 = vunpack.c.h.b16 %v124
    %v218 = vunpack.c.l.b16 %v125
    %v219 = vunpack.c.h.b16 %v125
    %v220 = vunpack.c.l.b16 %v126
    %v221 = vunpack.c.l.b16 %v127
    %v222 = vunpack.c.h.b16 %v127
    %v223 = vunpack.c.l.b16 %v128
    %v224 = vunpack.c.h.b16 %v128
    %v225 = vunpack.c.l.b16 %v129
    %v226 = vunpack.c.l.b16 %v130
    %v227 = vunpack.c.h.b16 %v130
    %v228 = vunpack.c.l.b16 %v131
    %v229 = vunpack.c.h.b16 %v131
    %v230 = vunpack.c.l.b16 %v132
    %v231 = vpack.c.b16 %v216, %v211
    %v232 = vpack.c.b16 %v217, %v212
    %v233 = vpack.c.b16 %v218, %v213
    %v234 = vpack.c.b16 %v219, %v214
    %v235 = vpack.c.b16 %v220, %v215
    %v236 = vpack.c.b16 %v226, %v221
    %v237 = vpack.c.b16 %v227, %v222
    %v238 = vpack.c.b16 %v228, %v223
    %v239 = vpack.c.b16 %v229, %v224
    %v240 = vpack.c.b16 %v230, %v225
    %v315 = vunpack.c.l.b16 %v133
    %v316 = vunpack.c.l.b16 %v134
    %v317 = vunpack.c.l.b16 %v135
    %v318 = vunpack.c.l.b16 %v136
    %v319 = vunpack.c.l.b16 %v137
    %v320 = vunpack.c.l.b16 %v138
    %v321 = vunpack.c.l.b16 %v139
    %v322 = vunpack.c.l.b16 %v140
    %v323 = vunpack.c.l.b16 %v141
    %v324 = vunpack.c.l.b16 %v142
    %v325 = vunpack.c.l.b16 %v143
    %v326 = vunpack.c.l.b16 %v144
    %v327 = vunpack.c.l.b16 %v145
    %v328 = vunpack.c.l.b16 %v146
    %v329 = vunpack.c.l.b16 %v147
    %v330 = vunpack.c.l.b16 %v148
    %v331 = vunpack.c.l.b16 %v149
    %v332 = vunpack.c.l.b16 %v150
    %v333 = vunpack.c.l.b16 %v151
    %v334 = vunpack.c.l.b16 %v152
    %v335 = vunpack.c.l.b16 %v153
    %v336 = vunpack.c.l.b16 %v154
    %v337 = vunpack.c.l.b16 %v155
    %v338 = vunpack.c.l.b16 %v156
    %v339 = vunpack.c.l.b16 %v157
    %v340 = vunpack.c.l.b16 %v158
    %v341 = vunpack.c.l.b16 %v159
    %v342 = vunpack.c.l.b16 %v160
    %v343 = vunpack.c.l.b16 %v161
    %v344 = vunpack.c.l.b16 %v162
    %v345 = vunpack.c.l.b16 %v163
    %v346 = vunpack.c.l.b16 %v164
    %v347 = vunpack.c.l.b16 %v165
    %v348 = vunpack.c.l.b16 %v166
    %v349 = vunpack.c.l.b16 %v167
    %v350 = vunpack.c.l.b16 %v168
    %v351 = vunpack.c.l.b16 %v169
    %v352 = vunpack.c.l.b16 %v170
    %v353 = vunpack.c.l.b16 %v171
    %v354 = vunpack.c.l.b16 %v172
    %v355 = vunpack.c.l.b16 %v173
    %v356 = vunpack.c.l.b16 %v174
    %v357 = vunpack.c.l.b16 %v175
    %v358 = vunpack.c.l.b16 %v176
    %v359 = vunpack.c.l.b16 %v177
    %v360 = vunpack.c.l.b16 %v178
    %v361 = vunpack.c.l.b16 %v179
    %v362 = vunpack.c.l.b16 %v180
    %v363 = vunpack.c.l.b16 %v181
    %v364 = vunpack.c.l.b16 %v182
    %v365 = vunpack.c.l.b16 %v183
    %v366 = vunpack.c.l.b16 %v184
    %v367 = vunpack.c.l.b16 %v185
    %v368 = vunpack.c.l.b16 %v186
    %v369 = vunpack.c.l.b16 %v187
    %v370 = vunpack.c.l.b16 %v188
    %v371 = vunpack.c.l.b16 %v189
    %v372 = vunpack.c.l.b16 %v190
    %v373 = vunpack.c.l.b16 %v191
    %v374 = vunpack.c.l.b16 %v192
    %v375 = vunpack.c.l.b16 %v193
    %v376 = vunpack.c.l.b16 %v194
    %v377 = vunpack.c.l.b16 %v195
    %v378 = vunpack.c.l.b16 %v196
    %v379 = vunpack.c.l.b16 %v197
    %v380 = vunpack.c.l.b16 %v198
    %v381 = vpack.c.b16 %v316, %v315
    %v382 = vpack.c.b16 %v318, %v317
    %v383 = vpack.c.b16 %v320, %v319
    %v384 = vpack.c.b16 %v322, %v321
    %v385 = vpack.c.b16 %v324, %v323
    %v386 = vpack.c.b16 %v326, %v325
    %v387 = vpack.c.b16 %v328, %v327
    %v388 = vpack.c.b16 %v330, %v329
    %v389 = vpack.c.b16 %v332, %v331
    %v390 = vpack.c.b16 %v334, %v333
    %v391 = vpack.c.b16 %v336, %v335
    %v392 = vpack.c.b16 %v338, %v337
    %v393 = vpack.c.b16 %v340, %v339
    %v394 = vpack.c.b16 %v342, %v341
    %v395 = vpack.c.b16 %v344, %v343
    %v396 = vpack.c.b16 %v346, %v345
    %v397 = vpack.c.b16 %v348, %v347
    %v398 = vpack.c.b16 %v350, %v349
    %v399 = vpack.c.b16 %v352, %v351
    %v400 = vpack.c.b16 %v354, %v353
    %v401 = vpack.c.b16 %v356, %v355
    %v402 = vpack.c.b16 %v358, %v357
    %v403 = vpack.c.b16 %v360, %v359
    %v404 = vpack.c.b16 %v362, %v361
    %v405 = vpack.c.b16 %v364, %v363
    %v406 = vpack.c.b16 %v366, %v365
    %v407 = vpack.c.b16 %v368, %v367
    %v408 = vpack.c.b16 %v370, %v369
    %v409 = vpack.c.b16 %v372, %v371
    %v410 = vpack.c.b16 %v374, %v373
    %v411 = vpack.c.b16 %v376, %v375
    %v412 = vpack.c.b16 %v378, %v377
    %v413 = vpack.c.b16 %v380, %v379
    %vm447 = vcmask 130048
    %v449 = vsel %vm447, %v235, 0
    %v452 = vsel %vm447, %v240, 0
    %454 = vmatpush.bf16.msra.mxu0 %v388
    %455 = vmatpush.bf16.msra.mxu0 %v387
    %456 = vmatpush.bf16.msra.mxu0 %v386
    %457 = vmatpush.bf16.msra.mxu0 %v385
    %458 = vmatpush.bf16.msra.mxu0 %v384
    %459 = vmatpush.bf16.msra.mxu0 %v383
    %460 = vmatpush.bf16.msra.mxu0 %v382
    %461 = vmatpush.bf16.msra.mxu0 %v381
    %462 = vmatmul.bf16.gmra.mxu0 %v231
    %v463 = vpop.f32.mrf.mxu0
    %v464 = vadd.f32 0.0, %v463
    %v465 = vpop.f32.mrf.mxu0
    %v466 = vadd.f32 0.0, %v465
    %467 = vmatmul.bf16.gmra.mxu0 %v236
    %v468 = vpop.f32.mrf.mxu0
    %v469 = vadd.f32 0.0, %v468
    %v470 = vpop.f32.mrf.mxu0
    %v471 = vadd.f32 0.0, %v470
    %472 = vdwg.mxu0
    %473 = vmatpush.bf16.msra.mxu0 %v396
    %474 = vmatpush.bf16.msra.mxu0 %v395
    %475 = vmatpush.bf16.msra.mxu0 %v394
    %476 = vmatpush.bf16.msra.mxu0 %v393
    %477 = vmatpush.bf16.msra.mxu0 %v392
    %478 = vmatpush.bf16.msra.mxu0 %v391
    %479 = vmatpush.bf16.msra.mxu0 %v390
    %480 = vmatpush.bf16.msra.mxu0 %v389
    %481 = vmatmul.bf16.gmra.mxu0 %v232
    %v482 = vpop.f32.mrf.mxu0
    %v483 = vadd.f32 %v464, %v482
    %v484 = vpop.f32.mrf.mxu0
    %v485 = vadd.f32 %v466, %v484
    %486 = vmatmul.bf16.gmra.mxu0 %v237
    %v487 = vpop.f32.mrf.mxu0
    %v488 = vadd.f32 %v469, %v487
    %v489 = vpop.f32.mrf.mxu0
    %v490 = vadd.f32 %v471, %v489
    %491 = vdwg.mxu0
    %492 = vmatpush.bf16.msra.mxu0 %v404
    %493 = vmatpush.bf16.msra.mxu0 %v403
    %494 = vmatpush.bf16.msra.mxu0 %v402
    %495 = vmatpush.bf16.msra.mxu0 %v401
    %496 = vmatpush.bf16.msra.mxu0 %v400
    %497 = vmatpush.bf16.msra.mxu0 %v399
    %498 = vmatpush.bf16.msra.mxu0 %v398
    %499 = vmatpush.bf16.msra.mxu0 %v397
    %500 = vmatmul.bf16.gmra.mxu0 %v233
    %v501 = vpop.f32.mrf.mxu0
    %v502 = vadd.f32 %v483, %v501
    %v503 = vpop.f32.mrf.mxu0
    %v504 = vadd.f32 %v485, %v503
    %505 = vmatmul.bf16.gmra.mxu0 %v238
    %v506 = vpop.f32.mrf.mxu0
    %v507 = vadd.f32 %v488, %v506
    %v508 = vpop.f32.mrf.mxu0
    %v509 = vadd.f32 %v490, %v508
    %510 = vdwg.mxu0
    %511 = vmatpush.bf16.msra.mxu0 %v412
    %512 = vmatpush.bf16.msra.mxu0 %v411
    %513 = vmatpush.bf16.msra.mxu0 %v410
    %514 = vmatpush.bf16.msra.mxu0 %v409
    %515 = vmatpush.bf16.msra.mxu0 %v408
    %516 = vmatpush.bf16.msra.mxu0 %v407
    %517 = vmatpush.bf16.msra.mxu0 %v406
    %518 = vmatpush.bf16.msra.mxu0 %v405
    %519 = vmatmul.bf16.gmra.mxu0 %v234
    %v520 = vpop.f32.mrf.mxu0
    %v521 = vadd.f32 %v502, %v520
    %v522 = vpop.f32.mrf.mxu0
    %v523 = vadd.f32 %v504, %v522
    %524 = vmatmul.bf16.gmra.mxu0 %v239
    %v525 = vpop.f32.mrf.mxu0
    %v526 = vadd.f32 %v507, %v525
    %v527 = vpop.f32.mrf.mxu0
    %v528 = vadd.f32 %v509, %v527
    %529 = vdwg.mxu0
    %530 = vmatpush.bf16.msra.mxu0 0
    %531 = vmatpush.bf16.msra.mxu0 0
    %532 = vmatpush.bf16.msra.mxu0 0
    %533 = vmatpush.bf16.msra.mxu0 0
    %534 = vmatpush.bf16.msra.mxu0 0
    %535 = vmatpush.bf16.msra.mxu0 0
    %536 = vmatpush.bf16.msra.mxu0 0
    %537 = vmatpush.bf16.msra.mxu0 %v413
    %538 = vmatmul.bf16.gmra.mxu0 %v449
    %v539 = vpop.f32.mrf.mxu0
    %v540 = vadd.f32 %v521, %v539
    %v541 = vpop.f32.mrf.mxu0
    %v542 = vadd.f32 %v523, %v541
    %543 = vmatmul.bf16.gmra.mxu0 %v452
    %v544 = vpop.f32.mrf.mxu0
    %v545 = vadd.f32 %v526, %v544
    %v546 = vpop.f32.mrf.mxu0
    %v547 = vadd.f32 %v528, %v546
    %548 = vdwg.mxu0
    %v549 = vmax.f32 %v540, 0.0
    %v550 = vmax.f32 %v542, 0.0
    %v551 = vmax.f32 %v545, 0.0
    %v552 = vmax.f32 %v547, 0.0
    %v553 = vld [vmem:[#allocation4] sm:$0xff]
    %v554 = vld [vmem:[#allocation4 + $0x8] sm:$0xff]
    %v555 = vld [vmem:[#allocation4 + $0x10] sm:$0xff]
    %v556 = vld [vmem:[#allocation4 + $0x18] sm:$0xff]
    %v557 = vld [vmem:[#allocation4 + $0x20] sm:$0xff]
    %v558 = vld [vmem:[#allocation4 + $0x28] sm:$0xff]
    %v559 = vld [vmem:[#allocation4 + $0x30] sm:$0xff]
    %v560 = vld [vmem:[#allocation4 + $0x38] sm:$0xff]
    %v561 = vld [vmem:[#allocation4 + $0x40] sm:$0xff]
    %v562 = vld [vmem:[#allocation6] sm:$0xff]
    %v563 = vld [vmem:[#allocation6 + $0x8] sm:$0xff]
    %v564 = vld [vmem:[#allocation6 + $0x10] sm:$0xff]
    %v565 = vld [vmem:[#allocation6 + $0x18] sm:$0xff]
    %v566 = vld [vmem:[#allocation6 + $0x20] sm:$0xff]
    %v567 = vld [vmem:[#allocation6 + $0x28] sm:$0xff]
    %v568 = vld [vmem:[#allocation6 + $0x30] sm:$0xff]
    %v569 = vld [vmem:[#allocation6 + $0x38] sm:$0xff]
    %v570 = vld [vmem:[#allocation6 + $0x40] sm:$0xff]
    %572 = vset.pattern.permute.xlu0 0
    %573 = vperm.xlu0 %572, %v562
    %v574 = vpop.permute.xlu0 %573
    %577 = vset.pattern.permute.xlu0 0
    %578 = vperm.xlu0 %577, %v563
    %v579 = vpop.permute.xlu0 %578
    %582 = vset.pattern.permute.xlu0 0
    %583 = vperm.xlu0 %582, %v564
    %v584 = vpop.permute.xlu0 %583
    %587 = vset.pattern.permute.xlu0 0
    %588 = vperm.xlu0 %587, %v565
    %v589 = vpop.permute.xlu0 %588
    %592 = vset.pattern.permute.xlu0 0
    %593 = vperm.xlu0 %592, %v566
    %v594 = vpop.permute.xlu0 %593
    %597 = vset.pattern.permute.xlu0 0
    %598 = vperm.xlu0 %597, %v567
    %v599 = vpop.permute.xlu0 %598
    %602 = vset.pattern.permute.xlu0 0
    %603 = vperm.xlu0 %602, %v568
    %v604 = vpop.permute.xlu0 %603
    %607 = vset.pattern.permute.xlu0 0
    %608 = vperm.xlu0 %607, %v569
    %v609 = vpop.permute.xlu0 %608
    %612 = vset.pattern.permute.xlu0 0
    %613 = vperm.xlu0 %612, %v570
    %v614 = vpop.permute.xlu0 %613
    %vm616 = vcmask 261120
    %v618 = vsel %vm616, %v553, 0
    %v621 = vsel %vm616, %v554, 0
    %v624 = vsel %vm616, %v555, 0
    %v627 = vsel %vm616, %v556, 0
    %v630 = vsel %vm616, %v557, 0
    %v633 = vsel %vm616, %v558, 0
    %v636 = vsel %vm616, %v559, 0
    %v639 = vsel %vm616, %v560, 0
    %v642 = vsel %vm616, %v561, 0
    %644 = vmatpush.msra.mxu0 0.0
    %645 = vmatpush.msra.mxu0 0.0
    %646 = vmatpush.msra.mxu0 0.0
    %647 = vmatpush.msra.mxu0 0.0
    %648 = vmatpush.msra.mxu0 0.0
    %649 = vmatpush.msra.mxu0 0.0
    %650 = vmatpush.msra.mxu0 0.0
    %651 = vmatpush.msra.mxu0 0.0
    %652 = vmatpush.msra.mxu0 0.0
    %653 = vmatpush.msra.mxu0 0.0
    %654 = vmatpush.msra.mxu0 0.0
    %655 = vmatpush.msra.mxu0 0.0
    %656 = vmatpush.msra.mxu0 %v552
    %657 = vmatpush.msra.mxu0 %v551
    %658 = vmatpush.msra.mxu0 %v550
    %659 = vmatpush.msra.mxu0 %v549
    %660 = vmatmul.f32.gmra.mxu0 %v618
    %v661 = vpop.f32.mrf.mxu0
    %v662 = vadd.f32 %v574, %v661
    %663 = vmatmul.f32.gmra.mxu0 %v621
    %v664 = vpop.f32.mrf.mxu0
    %v665 = vadd.f32 %v579, %v664
    %666 = vmatmul.f32.gmra.mxu0 %v624
    %v667 = vpop.f32.mrf.mxu0
    %v668 = vadd.f32 %v584, %v667
    %669 = vmatmul.f32.gmra.mxu0 %v627
    %v670 = vpop.f32.mrf.mxu0
    %v671 = vadd.f32 %v589, %v670
    %672 = vmatmul.f32.gmra.mxu0 %v630
    %v673 = vpop.f32.mrf.mxu0
    %v674 = vadd.f32 %v594, %v673
    %675 = vmatmul.f32.gmra.mxu0 %v633
    %v676 = vpop.f32.mrf.mxu0
    %v677 = vadd.f32 %v599, %v676
    %678 = vmatmul.f32.gmra.mxu0 %v636
    %v679 = vpop.f32.mrf.mxu0
    %v680 = vadd.f32 %v604, %v679
    %681 = vmatmul.f32.gmra.mxu0 %v639
    %v682 = vpop.f32.mrf.mxu0
    %v683 = vadd.f32 %v609, %v682
    %684 = vmatmul.f32.gmra.mxu0 %v642
    %v685 = vpop.f32.mrf.mxu0
    %v686 = vadd.f32 %v614, %v685
    %687 = vdwg.mxu0
    %v688 = vmax.f32 %v662, 0.0
    %v689 = vmax.f32 %v665, 0.0
    %v690 = vmax.f32 %v668, 0.0
    %v691 = vmax.f32 %v671, 0.0
    %v692 = vmax.f32 %v674, 0.0
    %v693 = vmax.f32 %v677, 0.0
    %v694 = vmax.f32 %v680, 0.0
    %v695 = vmax.f32 %v683, 0.0
    %v696 = vmax.f32 %v686, 0.0
    %v697 = vld [vmem:[#allocation7] sm:$0xff]
    %v698 = vld [vmem:[#allocation7 + $0x8] sm:$0xff]
    %v699 = vld [vmem:[#allocation7 + $0x10] sm:$0xff]
    %v700 = vld [vmem:[#allocation7 + $0x18] sm:$0xff]
    %v701 = vld [vmem:[#allocation7 + $0x20] sm:$0xff]
    %v702 = vld [vmem:[#allocation7 + $0x28] sm:$0xff]
    %v703 = vld [vmem:[#allocation7 + $0x30] sm:$0xff]
    %v704 = vld [vmem:[#allocation7 + $0x38] sm:$0xff]
    %v705 = vld [vmem:[#allocation7 + $0x40] sm:$0xff]
    %v706 = vld [vmem:[#allocation7 + $0x48] sm:$0xff]
    %v707 = vld [vmem:[#allocation7 + $0x50] sm:$0xff]
    %v708 = vld [vmem:[#allocation7 + $0x58] sm:$0xff]
    %v709 = vld [vmem:[#allocation7 + $0x60] sm:$0xff]
    %v710 = vld [vmem:[#allocation7 + $0x68] sm:$0xff]
    %v711 = vld [vmem:[#allocation7 + $0x70] sm:$0xff]
    %v712 = vld [vmem:[#allocation7 + $0x78] sm:$0xff]
    %v713 = vld [vmem:[#allocation7 + $0x80] sm:$0xff]
    %v714 = vld [vmem:[#allocation7 + $0x88] sm:$0xff]
    %v715 = vld [vmem:[#allocation7 + $0x90] sm:$0xff]
    %v716 = vld [vmem:[#allocation7 + $0x98] sm:$0xff]
    %v717 = vld [vmem:[#allocation7 + $0xa0] sm:$0xff]
    %v718 = vld [vmem:[#allocation7 + $0xa8] sm:$0xff]
    %v719 = vld [vmem:[#allocation7 + $0xb0] sm:$0xff]
    %v720 = vld [vmem:[#allocation7 + $0xb8] sm:$0xff]
    %v721 = vld [vmem:[#allocation7 + $0xc0] sm:$0xff]
    %v722 = vld [vmem:[#allocation7 + $0xc8] sm:$0xff]
    %v723 = vld [vmem:[#allocation7 + $0xd0] sm:$0xff]
    %v724 = vld [vmem:[#allocation7 + $0xd8] sm:$0xff]
    %v725 = vld [vmem:[#allocation7 + $0xe0] sm:$0xff]
    %v726 = vld [vmem:[#allocation7 + $0xe8] sm:$0xff]
    %v727 = vld [vmem:[#allocation7 + $0xf0] sm:$0xff]
    %v728 = vld [vmem:[#allocation7 + $0xf8] sm:$0xff]
    %vm729 = vcmask 588800
    %v731 = vsel %vm729, %v697, 0
    %v734 = vsel %vm729, %v698, 0
    %v737 = vsel %vm729, %v699, 0
    %v740 = vsel %vm729, %v700, 0
    %v743 = vsel %vm729, %v701, 0
    %v746 = vsel %vm729, %v702, 0
    %v749 = vsel %vm729, %v703, 0
    %v752 = vsel %vm729, %v704, 0
    %v755 = vsel %vm729, %v705, 0
    %v758 = vsel %vm729, %v706, 0
    %v761 = vsel %vm729, %v707, 0
    %v764 = vsel %vm729, %v708, 0
    %v767 = vsel %vm729, %v709, 0
    %v770 = vsel %vm729, %v710, 0
    %v773 = vsel %vm729, %v711, 0
    %v776 = vsel %vm729, %v712, 0
    %v779 = vsel %vm729, %v713, 0
    %v782 = vsel %vm729, %v714, 0
    %v785 = vsel %vm729, %v715, 0
    %v788 = vsel %vm729, %v716, 0
    %v791 = vsel %vm729, %v717, 0
    %v794 = vsel %vm729, %v718, 0
    %v797 = vsel %vm729, %v719, 0
    %v800 = vsel %vm729, %v720, 0
    %v803 = vsel %vm729, %v721, 0
    %v806 = vsel %vm729, %v722, 0
    %v809 = vsel %vm729, %v723, 0
    %v812 = vsel %vm729, %v724, 0
    %v815 = vsel %vm729, %v725, 0
    %v818 = vsel %vm729, %v726, 0
    %v821 = vsel %vm729, %v727, 0
    %v824 = vsel %vm729, %v728, 0
    %826 = vmatpush.msra.mxu0 0.0
    %827 = vmatpush.msra.mxu0 0.0
    %828 = vmatpush.msra.mxu0 0.0
    %829 = vmatpush.msra.mxu0 0.0
    %830 = vmatpush.msra.mxu0 0.0
    %831 = vmatpush.msra.mxu0 0.0
    %832 = vmatpush.msra.mxu0 0.0
    %833 = vmatpush.msra.mxu0 %v696
    %834 = vmatpush.msra.mxu0 %v695
    %835 = vmatpush.msra.mxu0 %v694
    %836 = vmatpush.msra.mxu0 %v693
    %837 = vmatpush.msra.mxu0 %v692
    %838 = vmatpush.msra.mxu0 %v691
    %839 = vmatpush.msra.mxu0 %v690
    %840 = vmatpush.msra.mxu0 %v689
    %841 = vmatpush.msra.mxu0 %v688
    %842 = vmatmul.f32.gmra.mxu0 %v731
    %v843 = vpop.f32.mrf.mxu0
    %v844 = vadd.f32 0.0, %v843
    %845 = vmatmul.f32.gmra.mxu0 %v734
    %v846 = vpop.f32.mrf.mxu0
    %v847 = vadd.f32 0.0, %v846
    %848 = vmatmul.f32.gmra.mxu0 %v737
    %v849 = vpop.f32.mrf.mxu0
    %v850 = vadd.f32 0.0, %v849
    %851 = vmatmul.f32.gmra.mxu0 %v740
    %v852 = vpop.f32.mrf.mxu0
    %v853 = vadd.f32 0.0, %v852
    %854 = vmatmul.f32.gmra.mxu0 %v743
    %v855 = vpop.f32.mrf.mxu0
    %v856 = vadd.f32 0.0, %v855
    %857 = vmatmul.f32.gmra.mxu0 %v746
    %v858 = vpop.f32.mrf.mxu0
    %v859 = vadd.f32 0.0, %v858
    %860 = vmatmul.f32.gmra.mxu0 %v749
    %v861 = vpop.f32.mrf.mxu0
    %v862 = vadd.f32 0.0, %v861
    %863 = vmatmul.f32.gmra.mxu0 %v752
    %v864 = vpop.f32.mrf.mxu0
    %v865 = vadd.f32 0.0, %v864
    %866 = vmatmul.f32.gmra.mxu0 %v755
    %v867 = vpop.f32.mrf.mxu0
    %v868 = vadd.f32 0.0, %v867
    %869 = vmatmul.f32.gmra.mxu0 %v758
    %v870 = vpop.f32.mrf.mxu0
    %v871 = vadd.f32 0.0, %v870
    %872 = vmatmul.f32.gmra.mxu0 %v761
    %v873 = vpop.f32.mrf.mxu0
    %v874 = vadd.f32 0.0, %v873
    %875 = vmatmul.f32.gmra.mxu0 %v764
    %v876 = vpop.f32.mrf.mxu0
    %v877 = vadd.f32 0.0, %v876
    %878 = vmatmul.f32.gmra.mxu0 %v767
    %v879 = vpop.f32.mrf.mxu0
    %v880 = vadd.f32 0.0, %v879
    %881 = vmatmul.f32.gmra.mxu0 %v770
    %v882 = vpop.f32.mrf.mxu0
    %v883 = vadd.f32 0.0, %v882
    %884 = vmatmul.f32.gmra.mxu0 %v773
    %v885 = vpop.f32.mrf.mxu0
    %v886 = vadd.f32 0.0, %v885
    %887 = vmatmul.f32.gmra.mxu0 %v776
    %v888 = vpop.f32.mrf.mxu0
    %v889 = vadd.f32 0.0, %v888
    %890 = vmatmul.f32.gmra.mxu0 %v779
    %v891 = vpop.f32.mrf.mxu0
    %v892 = vadd.f32 0.0, %v891
    %893 = vmatmul.f32.gmra.mxu0 %v782
    %v894 = vpop.f32.mrf.mxu0
    %v895 = vadd.f32 0.0, %v894
    %896 = vmatmul.f32.gmra.mxu0 %v785
    %v897 = vpop.f32.mrf.mxu0
    %v898 = vadd.f32 0.0, %v897
    %899 = vmatmul.f32.gmra.mxu0 %v788
    %v900 = vpop.f32.mrf.mxu0
    %v901 = vadd.f32 0.0, %v900
    %902 = vmatmul.f32.gmra.mxu0 %v791
    %v903 = vpop.f32.mrf.mxu0
    %v904 = vadd.f32 0.0, %v903
    %905 = vmatmul.f32.gmra.mxu0 %v794
    %v906 = vpop.f32.mrf.mxu0
    %v907 = vadd.f32 0.0, %v906
    %908 = vmatmul.f32.gmra.mxu0 %v797
    %v909 = vpop.f32.mrf.mxu0
    %v910 = vadd.f32 0.0, %v909
    %911 = vmatmul.f32.gmra.mxu0 %v800
    %v912 = vpop.f32.mrf.mxu0
    %v913 = vadd.f32 0.0, %v912
    %914 = vmatmul.f32.gmra.mxu0 %v803
    %v915 = vpop.f32.mrf.mxu0
    %v916 = vadd.f32 0.0, %v915
    %917 = vmatmul.f32.gmra.mxu0 %v806
    %v918 = vpop.f32.mrf.mxu0
    %v919 = vadd.f32 0.0, %v918
    %920 = vmatmul.f32.gmra.mxu0 %v809
    %v921 = vpop.f32.mrf.mxu0
    %v922 = vadd.f32 0.0, %v921
    %923 = vmatmul.f32.gmra.mxu0 %v812
    %v924 = vpop.f32.mrf.mxu0
    %v925 = vadd.f32 0.0, %v924
    %926 = vmatmul.f32.gmra.mxu0 %v815
    %v927 = vpop.f32.mrf.mxu0
    %v928 = vadd.f32 0.0, %v927
    %929 = vmatmul.f32.gmra.mxu0 %v818
    %v930 = vpop.f32.mrf.mxu0
    %v931 = vadd.f32 0.0, %v930
    %932 = vmatmul.f32.gmra.mxu0 %v821
    %v933 = vpop.f32.mrf.mxu0
    %v934 = vadd.f32 0.0, %v933
    %935 = vmatmul.f32.gmra.mxu0 %v824
    %v936 = vpop.f32.mrf.mxu0
    %v937 = vadd.f32 0.0, %v936
    %938 = vdwg.mxu0
    %v939 = vmax.f32 %v844, %v892
    %v940 = vmax.f32 %v847, %v895
    %v941 = vmax.f32 %v850, %v898
    %v942 = vmax.f32 %v853, %v901
    %v943 = vmax.f32 %v856, %v904
    %v944 = vmax.f32 %v859, %v907
    %v945 = vmax.f32 %v862, %v910
    %v946 = vmax.f32 %v865, %v913
    %v947 = vmax.f32 %v868, %v916
    %v948 = vmax.f32 %v871, %v919
    %v949 = vmax.f32 %v874, %v922
    %v950 = vmax.f32 %v877, %v925
    %v951 = vmax.f32 %v880, %v928
    %v952 = vmax.f32 %v883, %v931
    %v953 = vmax.f32 %v886, %v934
    %v954 = vmax.f32 %v889, %v937
    %v955 = vld [vmem:[#allocation9] sm:$0xff]
    %v956 = vld [vmem:[#allocation9 + $0x8] sm:$0xff]
    %v957 = vld [vmem:[#allocation9 + $0x10] sm:$0xff]
    %v958 = vld [vmem:[#allocation9 + $0x18] sm:$0xff]
    %v959 = vld [vmem:[#allocation9 + $0x20] sm:$0xff]
    %v960 = vld [vmem:[#allocation9 + $0x28] sm:$0xff]
    %v961 = vld [vmem:[#allocation9 + $0x30] sm:$0xff]
    %v962 = vld [vmem:[#allocation9 + $0x38] sm:$0xff]
    %v963 = vld [vmem:[#allocation9 + $0x40] sm:$0xff]
    %v964 = vld [vmem:[#allocation9 + $0x48] sm:$0xff]
    %v965 = vld [vmem:[#allocation9 + $0x50] sm:$0xff]
    %v966 = vld [vmem:[#allocation9 + $0x58] sm:$0xff]
    %v967 = vld [vmem:[#allocation9 + $0x60] sm:$0xff]
    %v968 = vld [vmem:[#allocation9 + $0x68] sm:$0xff]
    %v969 = vld [vmem:[#allocation9 + $0x70] sm:$0xff]
    %v970 = vld [vmem:[#allocation9 + $0x78] sm:$0xff]
    %972 = vset.pattern.permute.xlu0 0
    %973 = vperm.xlu0 %972, %v955
    %v974 = vpop.permute.xlu0 %973
    %977 = vset.pattern.permute.xlu0 0
    %978 = vperm.xlu0 %977, %v956
    %v979 = vpop.permute.xlu0 %978
    %982 = vset.pattern.permute.xlu0 0
    %983 = vperm.xlu0 %982, %v957
    %v984 = vpop.permute.xlu0 %983
    %987 = vset.pattern.permute.xlu0 0
    %988 = vperm.xlu0 %987, %v958
    %v989 = vpop.permute.xlu0 %988
    %992 = vset.pattern.permute.xlu0 0
    %993 = vperm.xlu0 %992, %v959
    %v994 = vpop.permute.xlu0 %993
    %997 = vset.pattern.permute.xlu0 0
    %998 = vperm.xlu0 %997, %v960
    %v999 = vpop.permute.xlu0 %998
    %1002 = vset.pattern.permute.xlu0 0
    %1003 = vperm.xlu0 %1002, %v961
    %v1004 = vpop.permute.xlu0 %1003
    %1007 = vset.pattern.permute.xlu0 0
    %1008 = vperm.xlu0 %1007, %v962
    %v1009 = vpop.permute.xlu0 %1008
    %1012 = vset.pattern.permute.xlu0 0
    %1013 = vperm.xlu0 %1012, %v963
    %v1014 = vpop.permute.xlu0 %1013
    %1017 = vset.pattern.permute.xlu0 0
    %1018 = vperm.xlu0 %1017, %v964
    %v1019 = vpop.permute.xlu0 %1018
    %1022 = vset.pattern.permute.xlu0 0
    %1023 = vperm.xlu0 %1022, %v965
    %v1024 = vpop.permute.xlu0 %1023
    %1027 = vset.pattern.permute.xlu0 0
    %1028 = vperm.xlu0 %1027, %v966
    %v1029 = vpop.permute.xlu0 %1028
    %1032 = vset.pattern.permute.xlu0 0
    %1033 = vperm.xlu0 %1032, %v967
    %v1034 = vpop.permute.xlu0 %1033
    %1037 = vset.pattern.permute.xlu0 0
    %1038 = vperm.xlu0 %1037, %v968
    %v1039 = vpop.permute.xlu0 %1038
    %1042 = vset.pattern.permute.xlu0 0
    %1043 = vperm.xlu0 %1042, %v969
    %v1044 = vpop.permute.xlu0 %1043
    %1047 = vset.pattern.permute.xlu0 0
    %1048 = vperm.xlu0 %1047, %v970
    %v1049 = vpop.permute.xlu0 %1048
    %v1051 = vadd.f32 %v939, %v974
    %v1052 = vadd.f32 %v940, %v979
    %v1053 = vadd.f32 %v941, %v984
    %v1054 = vadd.f32 %v942, %v989
    %v1055 = vadd.f32 %v943, %v994
    %v1056 = vadd.f32 %v944, %v999
    %v1057 = vadd.f32 %v945, %v1004
    %v1058 = vadd.f32 %v946, %v1009
    %v1059 = vadd.f32 %v947, %v1014
    %v1060 = vadd.f32 %v948, %v1019
    %v1061 = vadd.f32 %v949, %v1024
    %v1062 = vadd.f32 %v950, %v1029
    %v1063 = vadd.f32 %v951, %v1034
    %v1064 = vadd.f32 %v952, %v1039
    %v1065 = vadd.f32 %v953, %v1044
    %v1066 = vadd.f32 %v954, %v1049
    %v1067 = vsub.f32 0.0, %v1051
    %v1068 = vsub.f32 0.0, %v1052
    %v1069 = vsub.f32 0.0, %v1053
    %v1070 = vsub.f32 0.0, %v1054
    %v1071 = vsub.f32 0.0, %v1055
    %v1072 = vsub.f32 0.0, %v1056
    %v1073 = vsub.f32 0.0, %v1057
    %v1074 = vsub.f32 0.0, %v1058
    %v1075 = vsub.f32 0.0, %v1059
    %v1076 = vsub.f32 0.0, %v1060
    %v1077 = vsub.f32 0.0, %v1061
    %v1078 = vsub.f32 0.0, %v1062
    %v1079 = vsub.f32 0.0, %v1063
    %v1080 = vsub.f32 0.0, %v1064
    %v1081 = vsub.f32 0.0, %v1065
    %v1082 = vsub.f32 0.0, %v1066
    %v1083 = vmin.f32 %v1067, 60.0
    %v1084 = vmin.f32 %v1068, 60.0
    %v1085 = vmin.f32 %v1069, 60.0
    %v1086 = vmin.f32 %v1070, 60.0
    %v1087 = vmin.f32 %v1071, 60.0
    %v1088 = vmin.f32 %v1072, 60.0
    %v1089 = vmin.f32 %v1073, 60.0
    %v1090 = vmin.f32 %v1074, 60.0
    %v1091 = vmin.f32 %v1075, 60.0
    %v1092 = vmin.f32 %v1076, 60.0
    %v1093 = vmin.f32 %v1077, 60.0
    %v1094 = vmin.f32 %v1078, 60.0
    %v1095 = vmin.f32 %v1079, 60.0
    %v1096 = vmin.f32 %v1080, 60.0
    %v1097 = vmin.f32 %v1081, 60.0
    %v1098 = vmin.f32 %v1082, 60.0
    %v1099 = vmul.f32 %v1083, 1.442695
    %v1100 = vpow.pop %v1099
    %v1101 = vmul.f32 %v1084, 1.442695
    %v1102 = vpow.pop %v1101
    %v1103 = vmul.f32 %v1085, 1.442695
    %v1104 = vpow.pop %v1103
    %v1105 = vmul.f32 %v1086, 1.442695
    %v1106 = vpow.pop %v1105
    %v1107 = vmul.f32 %v1087, 1.442695
    %v1108 = vpow.pop %v1107
    %v1109 = vmul.f32 %v1088, 1.442695
    %v1110 = vpow.pop %v1109
    %v1111 = vmul.f32 %v1089, 1.442695
    %v1112 = vpow.pop %v1111
    %v1113 = vmul.f32 %v1090, 1.442695
    %v1114 = vpow.pop %v1113
    %v1115 = vmul.f32 %v1091, 1.442695
    %v1116 = vpow.pop %v1115
    %v1117 = vmul.f32 %v1092, 1.442695
    %v1118 = vpow.pop %v1117
    %v1119 = vmul.f32 %v1093, 1.442695
    %v1120 = vpow.pop %v1119
    %v1121 = vmul.f32 %v1094, 1.442695
    %v1122 = vpow.pop %v1121
    %v1123 = vmul.f32 %v1095, 1.442695
    %v1124 = vpow.pop %v1123
    %v1125 = vmul.f32 %v1096, 1.442695
    %v1126 = vpow.pop %v1125
    %v1127 = vmul.f32 %v1097, 1.442695
    %v1128 = vpow.pop %v1127
    %v1129 = vmul.f32 %v1098, 1.442695
    %v1130 = vpow.pop %v1129
    %v1131 = vadd.f32 %v1100, 1.0
    %v1132 = vadd.f32 %v1102, 1.0
    %v1133 = vadd.f32 %v1104, 1.0
    %v1134 = vadd.f32 %v1106, 1.0
    %v1135 = vadd.f32 %v1108, 1.0
    %v1136 = vadd.f32 %v1110, 1.0
    %v1137 = vadd.f32 %v1112, 1.0
    %v1138 = vadd.f32 %v1114, 1.0
    %v1139 = vadd.f32 %v1116, 1.0
    %v1140 = vadd.f32 %v1118, 1.0
    %v1141 = vadd.f32 %v1120, 1.0
    %v1142 = vadd.f32 %v1122, 1.0
    %v1143 = vadd.f32 %v1124, 1.0
    %v1144 = vadd.f32 %v1126, 1.0
    %v1145 = vadd.f32 %v1128, 1.0
    %v1146 = vadd.f32 %v1130, 1.0
    %v1147 = vrcp.pop %v1131
    %v1148 = vrcp.pop %v1132
    %v1149 = vrcp.pop %v1133
    %v1150 = vrcp.pop %v1134
    %v1151 = vrcp.pop %v1135
    %v1152 = vrcp.pop %v1136
    %v1153 = vrcp.pop %v1137
    %v1154 = vrcp.pop %v1138
    %v1155 = vrcp.pop %v1139
    %v1156 = vrcp.pop %v1140
    %v1157 = vrcp.pop %v1141
    %v1158 = vrcp.pop %v1142
    %v1159 = vrcp.pop %v1143
    %v1160 = vrcp.pop %v1144
    %v1161 = vrcp.pop %v1145
    %v1162 = vrcp.pop %v1146
    %v1163 = vld [vmem:[#allocation10] sm:$0xff]
    %v1164 = vld [vmem:[#allocation10 + $0x8] sm:$0xff]
    %v1165 = vld [vmem:[#allocation10 + $0x10] sm:$0xff]
    %v1166 = vld [vmem:[#allocation10 + $0x18] sm:$0xff]
    %v1167 = vld [vmem:[#allocation10 + $0x20] sm:$0xff]
    %v1168 = vld [vmem:[#allocation10 + $0x28] sm:$0xff]
    %v1169 = vld [vmem:[#allocation10 + $0x30] sm:$0xff]
    %v1170 = vld [vmem:[#allocation10 + $0x38] sm:$0xff]
    %v1171 = vld [vmem:[#allocation10 + $0x40] sm:$0xff]
    %v1172 = vld [vmem:[#allocation10 + $0x48] sm:$0xff]
    %v1173 = vld [vmem:[#allocation10 + $0x50] sm:$0xff]
    %v1174 = vld [vmem:[#allocation10 + $0x58] sm:$0xff]
    %v1175 = vld [vmem:[#allocation10 + $0x60] sm:$0xff]
    %v1176 = vld [vmem:[#allocation10 + $0x68] sm:$0xff]
    %v1177 = vld [vmem:[#allocation10 + $0x70] sm:$0xff]
    %v1178 = vld [vmem:[#allocation10 + $0x78] sm:$0xff]
    %vm1179 = vcmask 523264
    %v1181 = vsel %vm1179, %v1147, 0
    %v1184 = vsel %vm1179, %v1148, 0
    %v1187 = vsel %vm1179, %v1149, 0
    %v1190 = vsel %vm1179, %v1150, 0
    %v1193 = vsel %vm1179, %v1151, 0
    %v1196 = vsel %vm1179, %v1152, 0
    %v1199 = vsel %vm1179, %v1153, 0
    %v1202 = vsel %vm1179, %v1154, 0
    %v1205 = vsel %vm1179, %v1155, 0
    %v1208 = vsel %vm1179, %v1156, 0
    %v1211 = vsel %vm1179, %v1157, 0
    %v1214 = vsel %vm1179, %v1158, 0
    %v1217 = vsel %vm1179, %v1159, 0
    %v1220 = vsel %vm1179, %v1160, 0
    %v1223 = vsel %vm1179, %v1161, 0
    %v1226 = vsel %vm1179, %v1162, 0
    %1228 = vmatpush.msra.mxu0 0.0
    %1229 = vmatpush.msra.mxu0 0.0
    %1230 = vmatpush.msra.mxu0 0.0
    %1231 = vmatpush.msra.mxu0 0.0
    %1232 = vmatpush.msra.mxu0 0.0
    %1233 = vmatpush.msra.mxu0 0.0
    %1234 = vmatpush.msra.mxu0 0.0
    %1235 = vmatpush.msra.mxu0 0.0
    %1236 = vmatpush.msra.mxu0 %v1177
    %1237 = vmatpush.msra.mxu0 %v1175
    %1238 = vmatpush.msra.mxu0 %v1173
    %1239 = vmatpush.msra.mxu0 %v1171
    %1240 = vmatpush.msra.mxu0 %v1169
    %1241 = vmatpush.msra.mxu0 %v1167
    %1242 = vmatpush.msra.mxu0 %v1165
    %1243 = vmatpush.msra.mxu0 %v1163
    %1244 = vmatmul.f32.gmra.mxu0 %v1181
    %v1245 = vpop.f32.mrf.mxu0
    %v1246 = vadd.f32 0.0, %v1245
    %1247 = vmatmul.f32.gmra.mxu0 %v1184
    %v1248 = vpop.f32.mrf.mxu0
    %v1249 = vadd.f32 0.0, %v1248
    %1250 = vmatmul.f32.gmra.mxu0 %v1187
    %v1251 = vpop.f32.mrf.mxu0
    %v1252 = vadd.f32 0.0, %v1251
    %1253 = vmatmul.f32.gmra.mxu0 %v1190
    %v1254 = vpop.f32.mrf.mxu0
    %v1255 = vadd.f32 0.0, %v1254
    %1256 = vmatmul.f32.gmra.mxu0 %v1193
    %v1257 = vpop.f32.mrf.mxu0
    %v1258 = vadd.f32 0.0, %v1257
    %1259 = vmatmul.f32.gmra.mxu0 %v1196
    %v1260 = vpop.f32.mrf.mxu0
    %v1261 = vadd.f32 0.0, %v1260
    %1262 = vmatmul.f32.gmra.mxu0 %v1199
    %v1263 = vpop.f32.mrf.mxu0
    %v1264 = vadd.f32 0.0, %v1263
    %1265 = vmatmul.f32.gmra.mxu0 %v1202
    %v1266 = vpop.f32.mrf.mxu0
    %v1267 = vadd.f32 0.0, %v1266
    %1268 = vmatmul.f32.gmra.mxu0 %v1205
    %v1269 = vpop.f32.mrf.mxu0
    %v1270 = vadd.f32 0.0, %v1269
    %1271 = vmatmul.f32.gmra.mxu0 %v1208
    %v1272 = vpop.f32.mrf.mxu0
    %v1273 = vadd.f32 0.0, %v1272
    %1274 = vmatmul.f32.gmra.mxu0 %v1211
    %v1275 = vpop.f32.mrf.mxu0
    %v1276 = vadd.f32 0.0, %v1275
    %1277 = vmatmul.f32.gmra.mxu0 %v1214
    %v1278 = vpop.f32.mrf.mxu0
    %v1279 = vadd.f32 0.0, %v1278
    %1280 = vmatmul.f32.gmra.mxu0 %v1217
    %v1281 = vpop.f32.mrf.mxu0
    %v1282 = vadd.f32 0.0, %v1281
    %1283 = vmatmul.f32.gmra.mxu0 %v1220
    %v1284 = vpop.f32.mrf.mxu0
    %v1285 = vadd.f32 0.0, %v1284
    %1286 = vmatmul.f32.gmra.mxu0 %v1223
    %v1287 = vpop.f32.mrf.mxu0
    %v1288 = vadd.f32 0.0, %v1287
    %1289 = vmatmul.f32.gmra.mxu0 %v1226
    %v1290 = vpop.f32.mrf.mxu0
    %v1291 = vadd.f32 0.0, %v1290
    %1292 = vdwg.mxu0
    %1293 = vmatpush.msra.mxu0 0.0
    %1294 = vmatpush.msra.mxu0 0.0
    %1295 = vmatpush.msra.mxu0 0.0
    %1296 = vmatpush.msra.mxu0 0.0
    %1297 = vmatpush.msra.mxu0 0.0
    %1298 = vmatpush.msra.mxu0 0.0
    %1299 = vmatpush.msra.mxu0 0.0
    %1300 = vmatpush.msra.mxu0 0.0
    %1301 = vmatpush.msra.mxu0 %v1178
    %1302 = vmatpush.msra.mxu0 %v1176
    %1303 = vmatpush.msra.mxu0 %v1174
    %1304 = vmatpush.msra.mxu0 %v1172
    %1305 = vmatpush.msra.mxu0 %v1170
    %1306 = vmatpush.msra.mxu0 %v1168
    %1307 = vmatpush.msra.mxu0 %v1166
    %1308 = vmatpush.msra.mxu0 %v1164
    %1309 = vmatmul.f32.gmra.mxu0 %v1181
    %v1310 = vpop.f32.mrf.mxu0
    %v1311 = vadd.f32 0.0, %v1310
    %1312 = vmatmul.f32.gmra.mxu0 %v1184
    %v1313 = vpop.f32.mrf.mxu0
    %v1314 = vadd.f32 0.0, %v1313
    %1315 = vmatmul.f32.gmra.mxu0 %v1187
    %v1316 = vpop.f32.mrf.mxu0
    %v1317 = vadd.f32 0.0, %v1316
    %1318 = vmatmul.f32.gmra.mxu0 %v1190
    %v1319 = vpop.f32.mrf.mxu0
    %v1320 = vadd.f32 0.0, %v1319
    %1321 = vmatmul.f32.gmra.mxu0 %v1193
    %v1322 = vpop.f32.mrf.mxu0
    %v1323 = vadd.f32 0.0, %v1322
    %1324 = vmatmul.f32.gmra.mxu0 %v1196
    %v1325 = vpop.f32.mrf.mxu0
    %v1326 = vadd.f32 0.0, %v1325
    %1327 = vmatmul.f32.gmra.mxu0 %v1199
    %v1328 = vpop.f32.mrf.mxu0
    %v1329 = vadd.f32 0.0, %v1328
    %1330 = vmatmul.f32.gmra.mxu0 %v1202
    %v1331 = vpop.f32.mrf.mxu0
    %v1332 = vadd.f32 0.0, %v1331
    %1333 = vmatmul.f32.gmra.mxu0 %v1205
    %v1334 = vpop.f32.mrf.mxu0
    %v1335 = vadd.f32 0.0, %v1334
    %1336 = vmatmul.f32.gmra.mxu0 %v1208
    %v1337 = vpop.f32.mrf.mxu0
    %v1338 = vadd.f32 0.0, %v1337
    %1339 = vmatmul.f32.gmra.mxu0 %v1211
    %v1340 = vpop.f32.mrf.mxu0
    %v1341 = vadd.f32 0.0, %v1340
    %1342 = vmatmul.f32.gmra.mxu0 %v1214
    %v1343 = vpop.f32.mrf.mxu0
    %v1344 = vadd.f32 0.0, %v1343
    %1345 = vmatmul.f32.gmra.mxu0 %v1217
    %v1346 = vpop.f32.mrf.mxu0
    %v1347 = vadd.f32 0.0, %v1346
    %1348 = vmatmul.f32.gmra.mxu0 %v1220
    %v1349 = vpop.f32.mrf.mxu0
    %v1350 = vadd.f32 0.0, %v1349
    %1351 = vmatmul.f32.gmra.mxu0 %v1223
    %v1352 = vpop.f32.mrf.mxu0
    %v1353 = vadd.f32 0.0, %v1352
    %1354 = vmatmul.f32.gmra.mxu0 %v1226
    %v1355 = vpop.f32.mrf.mxu0
    %v1356 = vadd.f32 0.0, %v1355
    %1357 = vdwg.mxu0
    %1358 = vst [vmem:[%s7] sm:$0xff] %v1246
    %1359 = vst [vmem:[%s7 + $0x8] sm:$0xff] %v1311
    %1360 = vst [vmem:[%s7 + $0x10] sm:$0xff] %v1249
    %1361 = vst [vmem:[%s7 + $0x18] sm:$0xff] %v1314
    %1362 = vst [vmem:[%s7 + $0x20] sm:$0xff] %v1252
    %1363 = vst [vmem:[%s7 + $0x28] sm:$0xff] %v1317
    %1364 = vst [vmem:[%s7 + $0x30] sm:$0xff] %v1255
    %1365 = vst [vmem:[%s7 + $0x38] sm:$0xff] %v1320
    %1366 = vst [vmem:[%s7 + $0x40] sm:$0xff] %v1258
    %1367 = vst [vmem:[%s7 + $0x48] sm:$0xff] %v1323
    %1368 = vst [vmem:[%s7 + $0x50] sm:$0xff] %v1261
    %1369 = vst [vmem:[%s7 + $0x58] sm:$0xff] %v1326
    %1370 = vst [vmem:[%s7 + $0x60] sm:$0xff] %v1264
    %1371 = vst [vmem:[%s7 + $0x68] sm:$0xff] %v1329
    %1372 = vst [vmem:[%s7 + $0x70] sm:$0xff] %v1267
    %1373 = vst [vmem:[%s7 + $0x78] sm:$0xff] %v1332
    %1374 = vst [vmem:[%s7 + $0x80] sm:$0xff] %v1270
    %1375 = vst [vmem:[%s7 + $0x88] sm:$0xff] %v1335
    %1376 = vst [vmem:[%s7 + $0x90] sm:$0xff] %v1273
    %1377 = vst [vmem:[%s7 + $0x98] sm:$0xff] %v1338
    %1378 = vst [vmem:[%s7 + $0xa0] sm:$0xff] %v1276
    %1379 = vst [vmem:[%s7 + $0xa8] sm:$0xff] %v1341
    %1380 = vst [vmem:[%s7 + $0xb0] sm:$0xff] %v1279
    %1381 = vst [vmem:[%s7 + $0xb8] sm:$0xff] %v1344
    %1382 = vst [vmem:[%s7 + $0xc0] sm:$0xff] %v1282
    %1383 = vst [vmem:[%s7 + $0xc8] sm:$0xff] %v1347
    %1384 = vst [vmem:[%s7 + $0xd0] sm:$0xff] %v1285
    %1385 = vst [vmem:[%s7 + $0xd8] sm:$0xff] %v1350
    %1386 = vst [vmem:[%s7 + $0xe0] sm:$0xff] %v1288
    %1387 = vst [vmem:[%s7 + $0xe8] sm:$0xff] %v1353
    %1388 = vst [vmem:[%s7 + $0xf0] sm:$0xff] %v1291
    %1389 = vst [vmem:[%s7 + $0xf8] sm:$0xff] %v1356
    %v1390 = vld [vmem:[#allocation10] sm:$0xff]
    %v1391 = vld [vmem:[#allocation10 + $0x8] sm:$0xff]
    %v1392 = vld [vmem:[#allocation10 + $0x10] sm:$0xff]
    %v1393 = vld [vmem:[#allocation10 + $0x18] sm:$0xff]
    %v1394 = vld [vmem:[#allocation10 + $0x20] sm:$0xff]
    %v1395 = vld [vmem:[#allocation10 + $0x28] sm:$0xff]
    %v1396 = vld [vmem:[#allocation10 + $0x30] sm:$0xff]
    %v1397 = vld [vmem:[#allocation10 + $0x38] sm:$0xff]
    %v1398 = vld [vmem:[#allocation10 + $0x40] sm:$0xff]
    %v1399 = vld [vmem:[#allocation10 + $0x48] sm:$0xff]
    %v1400 = vld [vmem:[#allocation10 + $0x50] sm:$0xff]
    %v1401 = vld [vmem:[#allocation10 + $0x58] sm:$0xff]
    %v1402 = vld [vmem:[#allocation10 + $0x60] sm:$0xff]
    %v1403 = vld [vmem:[#allocation10 + $0x68] sm:$0xff]
    %v1404 = vld [vmem:[#allocation10 + $0x70] sm:$0xff]
    %v1405 = vld [vmem:[#allocation10 + $0x78] sm:$0xff]
    %1406 = vrot.lane.b32.xlu0 %v1147, 64
    %v1407 = vpop.permute.xlu0 %1406
    %1408 = vrot.lane.b32.xlu0 %v1148, 64
    %v1409 = vpop.permute.xlu0 %1408
    %1410 = vrot.lane.b32.xlu0 %v1149, 64
    %v1411 = vpop.permute.xlu0 %1410
    %1412 = vrot.lane.b32.xlu0 %v1150, 64
    %v1413 = vpop.permute.xlu0 %1412
    %1414 = vrot.lane.b32.xlu0 %v1151, 64
    %v1415 = vpop.permute.xlu0 %1414
    %1416 = vrot.lane.b32.xlu0 %v1152, 64
    %v1417 = vpop.permute.xlu0 %1416
    %1418 = vrot.lane.b32.xlu0 %v1153, 64
    %v1419 = vpop.permute.xlu0 %1418
    %1420 = vrot.lane.b32.xlu0 %v1154, 64
    %v1421 = vpop.permute.xlu0 %1420
    %1422 = vrot.lane.b32.xlu0 %v1155, 64
    %v1423 = vpop.permute.xlu0 %1422
    %1424 = vrot.lane.b32.xlu0 %v1156, 64
    %v1425 = vpop.permute.xlu0 %1424
    %1426 = vrot.lane.b32.xlu0 %v1157, 64
    %v1427 = vpop.permute.xlu0 %1426
    %1428 = vrot.lane.b32.xlu0 %v1158, 64
    %v1429 = vpop.permute.xlu0 %1428
    %1430 = vrot.lane.b32.xlu0 %v1159, 64
    %v1431 = vpop.permute.xlu0 %1430
    %1432 = vrot.lane.b32.xlu0 %v1160, 64
    %v1433 = vpop.permute.xlu0 %1432
    %1434 = vrot.lane.b32.xlu0 %v1161, 64
    %v1435 = vpop.permute.xlu0 %1434
    %1436 = vrot.lane.b32.xlu0 %v1162, 64
    %v1437 = vpop.permute.xlu0 %1436
    %v1438 = vsel %vm1179, %v1407, 0
    %v1440 = vsel %vm1179, %v1409, 0
    %v1442 = vsel %vm1179, %v1411, 0
    %v1444 = vsel %vm1179, %v1413, 0
    %v1446 = vsel %vm1179, %v1415, 0
    %v1448 = vsel %vm1179, %v1417, 0
    %v1450 = vsel %vm1179, %v1419, 0
    %v1452 = vsel %vm1179, %v1421, 0
    %v1454 = vsel %vm1179, %v1423, 0
    %v1456 = vsel %vm1179, %v1425, 0
    %v1458 = vsel %vm1179, %v1427, 0
    %v1460 = vsel %vm1179, %v1429, 0
    %v1462 = vsel %vm1179, %v1431, 0
    %v1464 = vsel %vm1179, %v1433, 0
    %v1466 = vsel %vm1179, %v1435, 0
    %v1468 = vsel %vm1179, %v1437, 0
    %1470 = vmatpush.msra.mxu0 0.0
    %1471 = vmatpush.msra.mxu0 0.0
    %1472 = vmatpush.msra.mxu0 0.0
    %1473 = vmatpush.msra.mxu0 0.0
    %1474 = vmatpush.msra.mxu0 0.0
    %1475 = vmatpush.msra.mxu0 0.0
    %1476 = vmatpush.msra.mxu0 0.0
    %1477 = vmatpush.msra.mxu0 0.0
    %1478 = vmatpush.msra.mxu0 %v1404
    %1479 = vmatpush.msra.mxu0 %v1402
    %1480 = vmatpush.msra.mxu0 %v1400
    %1481 = vmatpush.msra.mxu0 %v1398
    %1482 = vmatpush.msra.mxu0 %v1396
    %1483 = vmatpush.msra.mxu0 %v1394
    %1484 = vmatpush.msra.mxu0 %v1392
    %1485 = vmatpush.msra.mxu0 %v1390
    %1486 = vmatmul.f32.gmra.mxu0 %v1438
    %v1487 = vpop.f32.mrf.mxu0
    %v1488 = vadd.f32 0.0, %v1487
    %1489 = vmatmul.f32.gmra.mxu0 %v1440
    %v1490 = vpop.f32.mrf.mxu0
    %v1491 = vadd.f32 0.0, %v1490
    %1492 = vmatmul.f32.gmra.mxu0 %v1442
    %v1493 = vpop.f32.mrf.mxu0
    %v1494 = vadd.f32 0.0, %v1493
    %1495 = vmatmul.f32.gmra.mxu0 %v1444
    %v1496 = vpop.f32.mrf.mxu0
    %v1497 = vadd.f32 0.0, %v1496
    %1498 = vmatmul.f32.gmra.mxu0 %v1446
    %v1499 = vpop.f32.mrf.mxu0
    %v1500 = vadd.f32 0.0, %v1499
    %1501 = vmatmul.f32.gmra.mxu0 %v1448
    %v1502 = vpop.f32.mrf.mxu0
    %v1503 = vadd.f32 0.0, %v1502
    %1504 = vmatmul.f32.gmra.mxu0 %v1450
    %v1505 = vpop.f32.mrf.mxu0
    %v1506 = vadd.f32 0.0, %v1505
    %1507 = vmatmul.f32.gmra.mxu0 %v1452
    %v1508 = vpop.f32.mrf.mxu0
    %v1509 = vadd.f32 0.0, %v1508
    %1510 = vmatmul.f32.gmra.mxu0 %v1454
    %v1511 = vpop.f32.mrf.mxu0
    %v1512 = vadd.f32 0.0, %v1511
    %1513 = vmatmul.f32.gmra.mxu0 %v1456
    %v1514 = vpop.f32.mrf.mxu0
    %v1515 = vadd.f32 0.0, %v1514
    %1516 = vmatmul.f32.gmra.mxu0 %v1458
    %v1517 = vpop.f32.mrf.mxu0
    %v1518 = vadd.f32 0.0, %v1517
    %1519 = vmatmul.f32.gmra.mxu0 %v1460
    %v1520 = vpop.f32.mrf.mxu0
    %v1521 = vadd.f32 0.0, %v1520
    %1522 = vmatmul.f32.gmra.mxu0 %v1462
    %v1523 = vpop.f32.mrf.mxu0
    %v1524 = vadd.f32 0.0, %v1523
    %1525 = vmatmul.f32.gmra.mxu0 %v1464
    %v1526 = vpop.f32.mrf.mxu0
    %v1527 = vadd.f32 0.0, %v1526
    %1528 = vmatmul.f32.gmra.mxu0 %v1466
    %v1529 = vpop.f32.mrf.mxu0
    %v1530 = vadd.f32 0.0, %v1529
    %1531 = vmatmul.f32.gmra.mxu0 %v1468
    %v1532 = vpop.f32.mrf.mxu0
    %v1533 = vadd.f32 0.0, %v1532
    %1534 = vdwg.mxu0
    %1535 = vmatpush.msra.mxu0 0.0
    %1536 = vmatpush.msra.mxu0 0.0
    %1537 = vmatpush.msra.mxu0 0.0
    %1538 = vmatpush.msra.mxu0 0.0
    %1539 = vmatpush.msra.mxu0 0.0
    %1540 = vmatpush.msra.mxu0 0.0
    %1541 = vmatpush.msra.mxu0 0.0
    %1542 = vmatpush.msra.mxu0 0.0
    %1543 = vmatpush.msra.mxu0 %v1405
    %1544 = vmatpush.msra.mxu0 %v1403
    %1545 = vmatpush.msra.mxu0 %v1401
    %1546 = vmatpush.msra.mxu0 %v1399
    %1547 = vmatpush.msra.mxu0 %v1397
    %1548 = vmatpush.msra.mxu0 %v1395
    %1549 = vmatpush.msra.mxu0 %v1393
    %1550 = vmatpush.msra.mxu0 %v1391
    %1551 = vmatmul.f32.gmra.mxu0 %v1438
    %v1552 = vpop.f32.mrf.mxu0
    %v1553 = vadd.f32 0.0, %v1552
    %1554 = vmatmul.f32.gmra.mxu0 %v1440
    %v1555 = vpop.f32.mrf.mxu0
    %v1556 = vadd.f32 0.0, %v1555
    %1557 = vmatmul.f32.gmra.mxu0 %v1442
    %v1558 = vpop.f32.mrf.mxu0
    %v1559 = vadd.f32 0.0, %v1558
    %1560 = vmatmul.f32.gmra.mxu0 %v1444
    %v1561 = vpop.f32.mrf.mxu0
    %v1562 = vadd.f32 0.0, %v1561
    %1563 = vmatmul.f32.gmra.mxu0 %v1446
    %v1564 = vpop.f32.mrf.mxu0
    %v1565 = vadd.f32 0.0, %v1564
    %1566 = vmatmul.f32.gmra.mxu0 %v1448
    %v1567 = vpop.f32.mrf.mxu0
    %v1568 = vadd.f32 0.0, %v1567
    %1569 = vmatmul.f32.gmra.mxu0 %v1450
    %v1570 = vpop.f32.mrf.mxu0
    %v1571 = vadd.f32 0.0, %v1570
    %1572 = vmatmul.f32.gmra.mxu0 %v1452
    %v1573 = vpop.f32.mrf.mxu0
    %v1574 = vadd.f32 0.0, %v1573
    %1575 = vmatmul.f32.gmra.mxu0 %v1454
    %v1576 = vpop.f32.mrf.mxu0
    %v1577 = vadd.f32 0.0, %v1576
    %1578 = vmatmul.f32.gmra.mxu0 %v1456
    %v1579 = vpop.f32.mrf.mxu0
    %v1580 = vadd.f32 0.0, %v1579
    %1581 = vmatmul.f32.gmra.mxu0 %v1458
    %v1582 = vpop.f32.mrf.mxu0
    %v1583 = vadd.f32 0.0, %v1582
    %1584 = vmatmul.f32.gmra.mxu0 %v1460
    %v1585 = vpop.f32.mrf.mxu0
    %v1586 = vadd.f32 0.0, %v1585
    %1587 = vmatmul.f32.gmra.mxu0 %v1462
    %v1588 = vpop.f32.mrf.mxu0
    %v1589 = vadd.f32 0.0, %v1588
    %1590 = vmatmul.f32.gmra.mxu0 %v1464
    %v1591 = vpop.f32.mrf.mxu0
    %v1592 = vadd.f32 0.0, %v1591
    %1593 = vmatmul.f32.gmra.mxu0 %v1466
    %v1594 = vpop.f32.mrf.mxu0
    %v1595 = vadd.f32 0.0, %v1594
    %1596 = vmatmul.f32.gmra.mxu0 %v1468
    %v1597 = vpop.f32.mrf.mxu0
    %v1598 = vadd.f32 0.0, %v1597
    %1599 = vdwg.mxu0
    %1600 = vst [vmem:[%s7 + $0x100] sm:$0xff] %v1488
    %1601 = vst [vmem:[%s7 + $0x108] sm:$0xff] %v1553
    %1602 = vst [vmem:[%s7 + $0x110] sm:$0xff] %v1491
    %1603 = vst [vmem:[%s7 + $0x118] sm:$0xff] %v1556
    %1604 = vst [vmem:[%s7 + $0x120] sm:$0xff] %v1494
    %1605 = vst [vmem:[%s7 + $0x128] sm:$0xff] %v1559
    %1606 = vst [vmem:[%s7 + $0x130] sm:$0xff] %v1497
    %1607 = vst [vmem:[%s7 + $0x138] sm:$0xff] %v1562
    %1608 = vst [vmem:[%s7 + $0x140] sm:$0xff] %v1500
    %1609 = vst [vmem:[%s7 + $0x148] sm:$0xff] %v1565
    %1610 = vst [vmem:[%s7 + $0x150] sm:$0xff] %v1503
    %1611 = vst [vmem:[%s7 + $0x158] sm:$0xff] %v1568
    %1612 = vst [vmem:[%s7 + $0x160] sm:$0xff] %v1506
    %1613 = vst [vmem:[%s7 + $0x168] sm:$0xff] %v1571
    %1614 = vst [vmem:[%s7 + $0x170] sm:$0xff] %v1509
    %1615 = vst [vmem:[%s7 + $0x178] sm:$0xff] %v1574
    %1616 = vst [vmem:[%s7 + $0x180] sm:$0xff] %v1512
    %1617 = vst [vmem:[%s7 + $0x188] sm:$0xff] %v1577
    %1618 = vst [vmem:[%s7 + $0x190] sm:$0xff] %v1515
    %1619 = vst [vmem:[%s7 + $0x198] sm:$0xff] %v1580
    %1620 = vst [vmem:[%s7 + $0x1a0] sm:$0xff] %v1518
    %1621 = vst [vmem:[%s7 + $0x1a8] sm:$0xff] %v1583
    %1622 = vst [vmem:[%s7 + $0x1b0] sm:$0xff] %v1521
    %1623 = vst [vmem:[%s7 + $0x1b8] sm:$0xff] %v1586
    %1624 = vst [vmem:[%s7 + $0x1c0] sm:$0xff] %v1524
    %1625 = vst [vmem:[%s7 + $0x1c8] sm:$0xff] %v1589
    %1626 = vst [vmem:[%s7 + $0x1d0] sm:$0xff] %v1527
    %1627 = vst [vmem:[%s7 + $0x1d8] sm:$0xff] %v1592
    %1628 = vst [vmem:[%s7 + $0x1e0] sm:$0xff] %v1530
    %1629 = vst [vmem:[%s7 + $0x1e8] sm:$0xff] %v1595
    %1630 = vst [vmem:[%s7 + $0x1f0] sm:$0xff] %v1533
    %1631 = vst [vmem:[%s7 + $0x1f8] sm:$0xff] %v1598
    // Predicated region
    $region54: #{forward.1} parent=1 // pred_check
      _
    $region55: #{forward.1} parent=1 // pred_check_branch
      %1633 = sbr.rel (0) target = $region57
    $region56: #{forward.1} parent=1 // pred_region
      _
    $region57: #{forward.1} parent=1 // pred_fallthru
      _
    // Predicated region
    $region58: #{forward.1} parent=1 // pred_check
      _
    $region59: #{forward.1} parent=1 // pred_check_branch
      %1635 = sbr.rel (0) target = $region61
    $region60: #{forward.1} parent=1 // pred_region
      _
    $region61: #{forward.1} parent=1 // pred_fallthru
      _
    %1636 = vsyncpa [#allocation3], 1
    %1637 = vsyncpa [#allocation5], 1
    %1638 = vsyncpa [#allocation8], 1
    %1639 = vsyncpa [#allocation11], 1

</llo_original>
